<compile_context>
chip_gen: v6e
topology: v6e:2x2x1
jax: 0.10.0
libtpu: 0.0.40
codegen_flags: <defaults>
</compile_context>

<pallas_src>
import functools

import jax
import jax.numpy as jnp
from jax.experimental import pallas as pl
from jax.experimental.pallas import tpu as pltpu


# ---------------------------------------------------------------------------
# Fused kernel: one grid step == a block of `bb` batch elements, all heads.
# ---------------------------------------------------------------------------
def _fused_attention_kernel(x_ref, wq_ref, bq_ref, wk_ref, bk_ref,
                            wv_ref, bv_ref, wo_ref, bo_ref, o_ref,
                            *, head_dim):
    bb, L, E = x_ref.shape
    M = bb * L
    xm = x_ref[...].reshape(M, E)                                   # (M, E)

    # ---- value projection (MXU), lane-dense slab ----
    v = jnp.dot(xm, wv_ref[...], preferred_element_type=jnp.float32) + bv_ref[...]
    vb = v.reshape(bb, L, E)

    # ---- scores, lane-dense "wide" form ----
    # For lane e (head h = e // head_dim):
    #   s[b,i,j,e] = <q_h(b,i), k_h(b,j)>   (same value on every lane of head h)
    # computed as sum_d q_rot_d ⊗ k_rot_d, where rot_d cyclically permutes
    # columns within each head (prepared host-side), so no in-kernel lane
    # shuffles or per-head slicing are needed.  The 1/sqrt(head_dim) scale is
    # already folded into wq/bq.
    s = None
    for d in range(head_dim):
        q_d = jnp.dot(xm, wq_ref[d], preferred_element_type=jnp.float32) + bq_ref[d]
        k_d = jnp.dot(xm, wk_ref[d], preferred_element_type=jnp.float32) + bk_ref[d]
        qb = q_d.reshape(bb, L, E)
        kb = k_d.reshape(bb, L, E)
        contrib = qb[:, :, None, :] * kb[:, None, :, :]             # (bb,L,L,E) VPU
        s = contrib if s is None else s + contrib

    # ---- per-head softmax over keys (axis=2); exact divide ----
    s = s - jnp.max(s, axis=2, keepdims=True)
    p = jnp.exp(s)
    p = p / jnp.sum(p, axis=2, keepdims=True)

    # ---- PV: broadcast multiply + sublane reduce (VPU/XLU, no MXU) ----
    o = jnp.sum(p * vb[:, None, :, :], axis=2)                      # (bb, L, E)

    # ---- output projection (MXU) ----
    out = jnp.dot(o.reshape(M, E), wo_ref[...],
                  preferred_element_type=jnp.float32) + bo_ref[...]
    o_ref[...] = out.reshape(bb, L, E).astype(o_ref.dtype)


# ---------------------------------------------------------------------------
# Host-side weight preparation (one-time re-layout, scale folding, rotations).
# ---------------------------------------------------------------------------
def _prepare_weights(params, n_heads):
    w_in = params["in_proj_weight"]        # (3E, E)
    b_in = params["in_proj_bias"]          # (3E,)
    w_out = params["out_proj_weight"]      # (E, E)
    b_out = params["out_proj_bias"]        # (E,)
    E = w_out.shape[0]
    hd = E // n_heads
    scale = 1.0 / float(hd) ** 0.5

    wq_t = w_in[:E].T * scale              # fold q-scale into the weights
    wk_t = w_in[E:2 * E].T
    wv_t = w_in[2 * E:].T
    bq = b_in[:E] * scale
    bk = b_in[E:2 * E]
    bv = b_in[2 * E:]

    # Column-rotated copies within each head (drives the lane-dense score trick).
    cols = jnp.arange(E)
    head = cols // hd
    off = cols % hd
    wq_rot, bq_rot, wk_rot, bk_rot = [], [], [], []
    for d in range(hd):
        perm = head * hd + (off + d) % hd
        wq_rot.append(wq_t[:, perm]); bq_rot.append(bq[perm])
        wk_rot.append(wk_t[:, perm]); bk_rot.append(bk[perm])
    wq_rot = jnp.stack(wq_rot, axis=0)                       # (hd, E, E)
    bq_rot = jnp.stack(bq_rot, axis=0).reshape(hd, 1, E)
    wk_rot = jnp.stack(wk_rot, axis=0)
    bk_rot = jnp.stack(bk_rot, axis=0).reshape(hd, 1, E)

    return (wq_rot, bq_rot, wk_rot, bk_rot,
            wv_t, bv.reshape(1, E), w_out.T, b_out.reshape(1, E))


def _tensorcores_per_chip():
    try:
        kind = jax.devices()[0].device_kind.lower()
    except Exception:
        return 1
    return 2 if "v7" in kind else 1


# ---------------------------------------------------------------------------
# Module forward: one pallas_call, generation-conditional grid.
# ---------------------------------------------------------------------------
def single_attention_layer_forward(features, params, n_heads):
    x = features["token_embeddings"]                   # (B, L, E)
    B, L, E = x.shape
    assert E % n_heads == 0
    hd = E // n_heads

    (wq_rot, bq_rot, wk_rot, bk_rot,
     wv_t, bv, wo_t, bo) = _prepare_weights(params, n_heads)

    # Multi-core chips (v7x): B-wide parallel grid so both TensorCores get work.
    # Single-core chips (v5e/v6e): fold the whole batch into one grid step.
    if _tensorcores_per_chip() >= 2 and B > 1:
        grid, bb, dims = (B,), 1, ("parallel",)
    else:
        grid, bb, dims = (1,), B, ("arbitrary",)

    kernel = functools.partial(_fused_attention_kernel, head_dim=hd)

    out = pl.pallas_call(
        kernel,
        out_shape=jax.ShapeDtypeStruct((B, L, E), x.dtype),
        grid=grid,
        in_specs=[
            pl.BlockSpec((bb, L, E), lambda b: (b, 0, 0)),        # x (batch block)
            pl.BlockSpec((hd, E, E), lambda b: (0, 0, 0)),        # Wq rotated copies
            pl.BlockSpec((hd, 1, E), lambda b: (0, 0, 0)),        # bq rotated copies
            pl.BlockSpec((hd, E, E), lambda b: (0, 0, 0)),        # Wk rotated copies
            pl.BlockSpec((hd, 1, E), lambda b: (0, 0, 0)),        # bk rotated copies
            pl.BlockSpec((E, E), lambda b: (0, 0)),               # Wv^T
            pl.BlockSpec((1, E), lambda b: (0, 0)),               # bv
            pl.BlockSpec((E, E), lambda b: (0, 0)),               # Wout^T
            pl.BlockSpec((1, E), lambda b: (0, 0)),               # bout
        ],
        out_specs=pl.BlockSpec((bb, L, E), lambda b: (b, 0, 0)),
        compiler_params=pltpu.CompilerParams(dimension_semantics=dims),
    )(x, wq_rot, bq_rot, wk_rot, bk_rot, wv_t, bv, wo_t, bo)

    new_features = dict(features)
    new_features["token_embeddings"] = out
    return new_features


# ---------------------------------------------------------------------------
# Pure-JAX reference (high precision) for the correctness check.
# ---------------------------------------------------------------------------
def reference_forward(features, params, n_heads):
    x = features["token_embeddings"]
    B, L, E = x.shape
    hd = E // n_heads
    hp = jax.lax.Precision.HIGHEST
    qkv = jnp.dot(x, params["in_proj_weight"].T, precision=hp) + params["in_proj_bias"]
    q, k, v = jnp.split(qkv, 3, axis=-1)

    def to_heads(t):
        return t.reshape(B, L, n_heads, hd).transpose(0, 2, 1, 3)

    qh, kh, vh = to_heads(q), to_heads(k), to_heads(v)
    s = jnp.einsum("bhqd,bhkd->bhqk", qh, kh, precision=hp) / (hd ** 0.5)
    p = jax.nn.softmax(s, axis=-1)
    o = jnp.einsum("bhqk,bhkd->bhqd", p, vh, precision=hp)
    o = o.transpose(0, 2, 1, 3).reshape(B, L, E)
    return jnp.dot(o, params["out_proj_weight"].T, precision=hp) + params["out_proj_bias"]


# ---------------------------------------------------------------------------
# Main
# ---------------------------------------------------------------------------
if __name__ == "__main__":
    B, L = 2, 8
    E, H = 48, 24          # embedding_dim=48, n_heads=24 (module default) -> head_dim=2

    key = jax.random.PRNGKey(0)
    k_x, k_win, k_bin, k_wout, k_bout = jax.random.split(key, 5)

    bound_in = (6.0 / (E + 3 * E)) ** 0.5
    bound_out = (1.0 / E) ** 0.5
    params = {
        "in_proj_weight": jax.random.uniform(k_win, (3 * E, E), jnp.float32,
                                             -bound_in, bound_in),
        "in_proj_bias": jax.random.uniform(k_bin, (3 * E,), jnp.float32,
                                           -bound_out, bound_out),
        "out_proj_weight": jax.random.uniform(k_wout, (E, E), jnp.float32,
                                              -bound_out, bound_out),
        "out_proj_bias": jax.random.uniform(k_bout, (E,), jnp.float32,
                                            -bound_out, bound_out),
    }

    features = {
        "token_embeddings": jax.random.normal(k_x, (B, L, E), jnp.float32),
    }

    out_features = single_attention_layer_forward(features, params, H)
    emb = jax.block_until_ready(out_features["token_embeddings"])

    ref = reference_forward(features, params, H)
    assert emb.shape == (B, L, E)
    # Exact-divide softmax; remaining slack only covers MXU default-precision
    # matmul passes inside the kernel vs. the HIGHEST-precision XLA reference.
    assert jnp.allclose(emb, ref, atol=3e-3, rtol=3e-3), "mismatch vs reference"

    print("KERNEL_OK")
</pallas_src>

<mosaic_0001>
module attributes {stable_mosaic.version = 11 : i64} {
  func.func @_fused_attention_kernel(%arg0: i32, %arg1: memref<2x8x48xf32, #tpu.memory_space<vmem>>, %arg2: memref<2x48x48xf32, #tpu.memory_space<vmem>>, %arg3: memref<2x1x48xf32, #tpu.memory_space<vmem>>, %arg4: memref<2x48x48xf32, #tpu.memory_space<vmem>>, %arg5: memref<2x1x48xf32, #tpu.memory_space<vmem>>, %arg6: memref<48x48xf32, #tpu.memory_space<vmem>>, %arg7: memref<1x48xf32, #tpu.memory_space<vmem>>, %arg8: memref<48x48xf32, #tpu.memory_space<vmem>>, %arg9: memref<1x48xf32, #tpu.memory_space<vmem>>, %arg10: memref<2x8x48xf32, #tpu.memory_space<vmem>>) attributes {dimension_semantics = [#tpu.dimension_semantics<arbitrary>], iteration_bounds = array<i64: 1>, scalar_prefetch = 0 : i64, scratch_operands = 0 : i64, tpu.core_type = #tpu.core_type<tc>, window_params = [{transform_indices = @transform_0, window_bounds = array<i64: 2, 8, 48>}, {pipeline_mode = #tpu.pipeline_mode<synchronous>, transform_indices = @transform_1, window_bounds = array<i64: 2, 48, 48>}, {pipeline_mode = #tpu.pipeline_mode<synchronous>, transform_indices = @transform_2, window_bounds = array<i64: 2, 1, 48>}, {pipeline_mode = #tpu.pipeline_mode<synchronous>, transform_indices = @transform_3, window_bounds = array<i64: 2, 48, 48>}, {pipeline_mode = #tpu.pipeline_mode<synchronous>, transform_indices = @transform_4, window_bounds = array<i64: 2, 1, 48>}, {pipeline_mode = #tpu.pipeline_mode<synchronous>, transform_indices = @transform_5, window_bounds = array<i64: 48, 48>}, {pipeline_mode = #tpu.pipeline_mode<synchronous>, transform_indices = @transform_6, window_bounds = array<i64: 1, 48>}, {pipeline_mode = #tpu.pipeline_mode<synchronous>, transform_indices = @transform_7, window_bounds = array<i64: 48, 48>}, {pipeline_mode = #tpu.pipeline_mode<synchronous>, transform_indices = @transform_8, window_bounds = array<i64: 1, 48>}, {transform_indices = @transform_9, window_bounds = array<i64: 2, 8, 48>}]} {
    %c0 = arith.constant 0 : index
    %c0_0 = arith.constant 0 : index
    %c0_1 = arith.constant 0 : index
    %0 = vector.load %arg1[%c0, %c0_0, %c0_1] : memref<2x8x48xf32, #tpu.memory_space<vmem>>, vector<2x8x48xf32>
    %1 = vector.shape_cast %0 : vector<2x8x48xf32> to vector<16x48xf32>
    %c0_2 = arith.constant 0 : index
    %c0_3 = arith.constant 0 : index
    %2 = vector.load %arg6[%c0_2, %c0_3] : memref<48x48xf32, #tpu.memory_space<vmem>>, vector<48x48xf32>
    %cst = arith.constant dense<0.000000e+00> : vector<16x48xf32>
    %3 = tpu.matmul %1, %2, %cst {dimension_numbers = #tpu.dot_dimension_numbers<[1], [0], [0], [1], [0, 0, 1, 1], [], []>} : vector<16x48xf32>, vector<48x48xf32>, vector<16x48xf32> -> vector<16x48xf32>
    %c0_4 = arith.constant 0 : index
    %c0_5 = arith.constant 0 : index
    %4 = vector.load %arg7[%c0_4, %c0_5] : memref<1x48xf32, #tpu.memory_space<vmem>>, vector<1x48xf32>
    %5 = vector.broadcast %4 : vector<1x48xf32> to vector<16x48xf32>
    %6 = arith.addf %3, %5 : vector<16x48xf32>
    %7 = vector.shape_cast %6 : vector<16x48xf32> to vector<2x8x48xf32>
    %c0_6 = arith.constant 0 : index
    %c0_7 = arith.constant 0 : index
    %c0_8 = arith.constant 0 : index
    %8 = vector.load %arg2[%c0_6, %c0_7, %c0_8] : memref<2x48x48xf32, #tpu.memory_space<vmem>>, vector<1x48x48xf32>
    %9 = vector.shape_cast %8 : vector<1x48x48xf32> to vector<48x48xf32>
    %cst_9 = arith.constant dense<0.000000e+00> : vector<16x48xf32>
    %10 = tpu.matmul %1, %9, %cst_9 {dimension_numbers = #tpu.dot_dimension_numbers<[1], [0], [0], [1], [0, 0, 1, 1], [], []>} : vector<16x48xf32>, vector<48x48xf32>, vector<16x48xf32> -> vector<16x48xf32>
    %c0_10 = arith.constant 0 : index
    %c0_11 = arith.constant 0 : index
    %c0_12 = arith.constant 0 : index
    %11 = vector.load %arg3[%c0_10, %c0_11, %c0_12] : memref<2x1x48xf32, #tpu.memory_space<vmem>>, vector<1x1x48xf32>
    %12 = vector.shape_cast %11 : vector<1x1x48xf32> to vector<1x48xf32>
    %13 = vector.broadcast %12 : vector<1x48xf32> to vector<16x48xf32>
    %14 = arith.addf %10, %13 : vector<16x48xf32>
    %c0_13 = arith.constant 0 : index
    %c0_14 = arith.constant 0 : index
    %c0_15 = arith.constant 0 : index
    %15 = vector.load %arg4[%c0_13, %c0_14, %c0_15] : memref<2x48x48xf32, #tpu.memory_space<vmem>>, vector<1x48x48xf32>
    %16 = vector.shape_cast %15 : vector<1x48x48xf32> to vector<48x48xf32>
    %cst_16 = arith.constant dense<0.000000e+00> : vector<16x48xf32>
    %17 = tpu.matmul %1, %16, %cst_16 {dimension_numbers = #tpu.dot_dimension_numbers<[1], [0], [0], [1], [0, 0, 1, 1], [], []>} : vector<16x48xf32>, vector<48x48xf32>, vector<16x48xf32> -> vector<16x48xf32>
    %c0_17 = arith.constant 0 : index
    %c0_18 = arith.constant 0 : index
    %c0_19 = arith.constant 0 : index
    %18 = vector.load %arg5[%c0_17, %c0_18, %c0_19] : memref<2x1x48xf32, #tpu.memory_space<vmem>>, vector<1x1x48xf32>
    %19 = vector.shape_cast %18 : vector<1x1x48xf32> to vector<1x48xf32>
    %20 = vector.broadcast %19 : vector<1x48xf32> to vector<16x48xf32>
    %21 = arith.addf %17, %20 : vector<16x48xf32>
    %22 = vector.shape_cast %14 : vector<16x48xf32> to vector<2x8x48xf32>
    %23 = vector.shape_cast %21 : vector<16x48xf32> to vector<2x8x48xf32>
    %24 = vector.shape_cast %22 : vector<2x8x48xf32> to vector<2x8x1x48xf32>
    %25 = vector.shape_cast %23 : vector<2x8x48xf32> to vector<2x1x8x48xf32>
    %26 = vector.broadcast %24 : vector<2x8x1x48xf32> to vector<2x8x8x48xf32>
    %27 = vector.broadcast %25 : vector<2x1x8x48xf32> to vector<2x8x8x48xf32>
    %28 = arith.mulf %26, %27 : vector<2x8x8x48xf32>
    %c1 = arith.constant 1 : index
    %c0_20 = arith.constant 0 : index
    %c0_21 = arith.constant 0 : index
    %29 = vector.load %arg2[%c1, %c0_20, %c0_21] : memref<2x48x48xf32, #tpu.memory_space<vmem>>, vector<1x48x48xf32>
    %30 = vector.shape_cast %29 : vector<1x48x48xf32> to vector<48x48xf32>
    %cst_22 = arith.constant dense<0.000000e+00> : vector<16x48xf32>
    %31 = tpu.matmul %1, %30, %cst_22 {dimension_numbers = #tpu.dot_dimension_numbers<[1], [0], [0], [1], [0, 0, 1, 1], [], []>} : vector<16x48xf32>, vector<48x48xf32>, vector<16x48xf32> -> vector<16x48xf32>
    %c1_23 = arith.constant 1 : index
    %c0_24 = arith.constant 0 : index
    %c0_25 = arith.constant 0 : index
    %32 = vector.load %arg3[%c1_23, %c0_24, %c0_25] : memref<2x1x48xf32, #tpu.memory_space<vmem>>, vector<1x1x48xf32>
    %33 = vector.shape_cast %32 : vector<1x1x48xf32> to vector<1x48xf32>
    %34 = vector.broadcast %33 : vector<1x48xf32> to vector<16x48xf32>
    %35 = arith.addf %31, %34 : vector<16x48xf32>
    %c1_26 = arith.constant 1 : index
    %c0_27 = arith.constant 0 : index
    %c0_28 = arith.constant 0 : index
    %36 = vector.load %arg4[%c1_26, %c0_27, %c0_28] : memref<2x48x48xf32, #tpu.memory_space<vmem>>, vector<1x48x48xf32>
    %37 = vector.shape_cast %36 : vector<1x48x48xf32> to vector<48x48xf32>
    %cst_29 = arith.constant dense<0.000000e+00> : vector<16x48xf32>
    %38 = tpu.matmul %1, %37, %cst_29 {dimension_numbers = #tpu.dot_dimension_numbers<[1], [0], [0], [1], [0, 0, 1, 1], [], []>} : vector<16x48xf32>, vector<48x48xf32>, vector<16x48xf32> -> vector<16x48xf32>
    %c1_30 = arith.constant 1 : index
    %c0_31 = arith.constant 0 : index
    %c0_32 = arith.constant 0 : index
    %39 = vector.load %arg5[%c1_30, %c0_31, %c0_32] : memref<2x1x48xf32, #tpu.memory_space<vmem>>, vector<1x1x48xf32>
    %40 = vector.shape_cast %39 : vector<1x1x48xf32> to vector<1x48xf32>
    %41 = vector.broadcast %40 : vector<1x48xf32> to vector<16x48xf32>
    %42 = arith.addf %38, %41 : vector<16x48xf32>
    %43 = vector.shape_cast %35 : vector<16x48xf32> to vector<2x8x48xf32>
    %44 = vector.shape_cast %42 : vector<16x48xf32> to vector<2x8x48xf32>
    %45 = vector.shape_cast %43 : vector<2x8x48xf32> to vector<2x8x1x48xf32>
    %46 = vector.shape_cast %44 : vector<2x8x48xf32> to vector<2x1x8x48xf32>
    %47 = vector.broadcast %45 : vector<2x8x1x48xf32> to vector<2x8x8x48xf32>
    %48 = vector.broadcast %46 : vector<2x1x8x48xf32> to vector<2x8x8x48xf32>
    %49 = arith.mulf %47, %48 : vector<2x8x8x48xf32>
    %50 = arith.addf %28, %49 : vector<2x8x8x48xf32>
    %cst_33 = arith.constant dense<0xFF800000> : vector<2x8x48xf32>
    %51 = vector.multi_reduction <maximumf>, %50, %cst_33 [2] : vector<2x8x8x48xf32> to vector<2x8x48xf32>
    %52 = vector.shape_cast %51 : vector<2x8x48xf32> to vector<2x8x1x48xf32>
    %53 = vector.broadcast %52 : vector<2x8x1x48xf32> to vector<2x8x8x48xf32>
    %54 = arith.subf %50, %53 : vector<2x8x8x48xf32>
    %55 = math.exp %54 : vector<2x8x8x48xf32>
    %cst_34 = arith.constant dense<0.000000e+00> : vector<2x8x48xf32>
    %56 = vector.multi_reduction <add>, %55, %cst_34 [2] : vector<2x8x8x48xf32> to vector<2x8x48xf32>
    %57 = vector.shape_cast %56 : vector<2x8x48xf32> to vector<2x8x1x48xf32>
    %58 = vector.broadcast %57 : vector<2x8x1x48xf32> to vector<2x8x8x48xf32>
    %59 = arith.divf %55, %58 : vector<2x8x8x48xf32>
    %60 = vector.shape_cast %7 : vector<2x8x48xf32> to vector<2x1x8x48xf32>
    %61 = vector.broadcast %60 : vector<2x1x8x48xf32> to vector<2x8x8x48xf32>
    %62 = arith.mulf %59, %61 : vector<2x8x8x48xf32>
    %cst_35 = arith.constant dense<0.000000e+00> : vector<2x8x48xf32>
    %63 = vector.multi_reduction <add>, %62, %cst_35 [2] : vector<2x8x8x48xf32> to vector<2x8x48xf32>
    %64 = vector.shape_cast %63 : vector<2x8x48xf32> to vector<16x48xf32>
    %c0_36 = arith.constant 0 : index
    %c0_37 = arith.constant 0 : index
    %65 = vector.load %arg8[%c0_36, %c0_37] : memref<48x48xf32, #tpu.memory_space<vmem>>, vector<48x48xf32>
    %cst_38 = arith.constant dense<0.000000e+00> : vector<16x48xf32>
    %66 = tpu.matmul %64, %65, %cst_38 {dimension_numbers = #tpu.dot_dimension_numbers<[1], [0], [0], [1], [0, 0, 1, 1], [], []>} : vector<16x48xf32>, vector<48x48xf32>, vector<16x48xf32> -> vector<16x48xf32>
    %c0_39 = arith.constant 0 : index
    %c0_40 = arith.constant 0 : index
    %67 = vector.load %arg9[%c0_39, %c0_40] : memref<1x48xf32, #tpu.memory_space<vmem>>, vector<1x48xf32>
    %68 = vector.broadcast %67 : vector<1x48xf32> to vector<16x48xf32>
    %69 = arith.addf %66, %68 : vector<16x48xf32>
    %70 = vector.shape_cast %69 : vector<16x48xf32> to vector<2x8x48xf32>
    %c0_41 = arith.constant 0 : index
    %c0_42 = arith.constant 0 : index
    %c0_43 = arith.constant 0 : index
    %71 = vector.load %arg10[%c0_41, %c0_42, %c0_43] : memref<2x8x48xf32, #tpu.memory_space<vmem>>, vector<2x8x48xf32>
    tpu.vector_store %arg10[%c0_41, %c0_42, %c0_43], %70 {strides = array<i32>} : memref<2x8x48xf32, #tpu.memory_space<vmem>>, vector<2x8x48xf32>,
    return
  }
  func.func @transform_0(%arg0: i32) -> (i32, i32, i32) {
    %c0_i32 = arith.constant 0 : i32
    %c0_i32_0 = arith.constant 0 : i32
    %c0_i32_1 = arith.constant 0 : i32
    return %arg0, %c0_i32, %c0_i32_0 : i32, i32, i32
  }
  func.func @transform_1(%arg0: i32) -> (i32, i32, i32) {
    %c0_i32 = arith.constant 0 : i32
    %c0_i32_0 = arith.constant 0 : i32
    %c0_i32_1 = arith.constant 0 : i32
    %c0_i32_2 = arith.constant 0 : i32
    return %c0_i32, %c0_i32_0, %c0_i32_1 : i32, i32, i32
  }
  func.func @transform_2(%arg0: i32) -> (i32, i32, i32) {
    %c0_i32 = arith.constant 0 : i32
    %c0_i32_0 = arith.constant 0 : i32
    %c0_i32_1 = arith.constant 0 : i32
    %c0_i32_2 = arith.constant 0 : i32
    return %c0_i32, %c0_i32_0, %c0_i32_1 : i32, i32, i32
  }
  func.func @transform_3(%arg0: i32) -> (i32, i32, i32) {
    %c0_i32 = arith.constant 0 : i32
    %c0_i32_0 = arith.constant 0 : i32
    %c0_i32_1 = arith.constant 0 : i32
    %c0_i32_2 = arith.constant 0 : i32
    return %c0_i32, %c0_i32_0, %c0_i32_1 : i32, i32, i32
  }
  func.func @transform_4(%arg0: i32) -> (i32, i32, i32) {
    %c0_i32 = arith.constant 0 : i32
    %c0_i32_0 = arith.constant 0 : i32
    %c0_i32_1 = arith.constant 0 : i32
    %c0_i32_2 = arith.constant 0 : i32
    return %c0_i32, %c0_i32_0, %c0_i32_1 : i32, i32, i32
  }
  func.func @transform_5(%arg0: i32) -> (i32, i32) {
    %c0_i32 = arith.constant 0 : i32
    %c0_i32_0 = arith.constant 0 : i32
    %c0_i32_1 = arith.constant 0 : i32
    return %c0_i32, %c0_i32_0 : i32, i32
  }
  func.func @transform_6(%arg0: i32) -> (i32, i32) {
    %c0_i32 = arith.constant 0 : i32
    %c0_i32_0 = arith.constant 0 : i32
    %c0_i32_1 = arith.constant 0 : i32
    return %c0_i32, %c0_i32_0 : i32, i32
  }
  func.func @transform_7(%arg0: i32) -> (i32, i32) {
    %c0_i32 = arith.constant 0 : i32
    %c0_i32_0 = arith.constant 0 : i32
    %c0_i32_1 = arith.constant 0 : i32
    return %c0_i32, %c0_i32_0 : i32, i32
  }
  func.func @transform_8(%arg0: i32) -> (i32, i32) {
    %c0_i32 = arith.constant 0 : i32
    %c0_i32_0 = arith.constant 0 : i32
    %c0_i32_1 = arith.constant 0 : i32
    return %c0_i32, %c0_i32_0 : i32, i32
  }
  func.func @transform_9(%arg0: i32) -> (i32, i32, i32) {
    %c0_i32 = arith.constant 0 : i32
    %c0_i32_0 = arith.constant 0 : i32
    %c0_i32_1 = arith.constant 0 : i32
    return %arg0, %c0_i32, %c0_i32_0 : i32, i32, i32
  }
}

</mosaic_0001>

<llo_original>
// kernel: tpu_custom_call.1
$region0: #{tpu_custom_call.1}
  #allocation0 [shape = 'u32[]', space=smem, size = 0x4, offset = 0x4, fixed_abs, tag = 'smem constant byte address 0x4 - core index']
  #allocation1 [shape = 'u32[144,128]{1,0:T(1,128)}', space=vmem, size = 0x12000, scoped, tag = 'internal scratch']
  %s0 = inlined_call_operand.hbm [shape: f32[2,8,48], index: 0, kind: input, shape index: {}]
  %s1 = inlined_call_operand.hbm [shape: f32[2,48,48], index: 1, kind: input, shape index: {}]
  %s2 = inlined_call_operand.vmem [shape: f32[2,1,48], index: 2, kind: input, shape index: {}]
  %s3 = inlined_call_operand.hbm [shape: f32[2,48,48], index: 3, kind: input, shape index: {}]
  %s4 = inlined_call_operand.vmem [shape: f32[2,1,48], index: 4, kind: input, shape index: {}]
  %s5 = inlined_call_operand.hbm [shape: f32[48,48], index: 5, kind: input, shape index: {}]
  %s6 = inlined_call_operand.vmem [shape: f32[1,48], index: 6, kind: input, shape index: {}]
  %s7 = inlined_call_operand.hbm [shape: f32[48,48], index: 7, kind: input, shape index: {}]
  %s8 = inlined_call_operand.vmem [shape: f32[1,48], index: 8, kind: input, shape index: {}]
  %s9 = inlined_call_operand.hbm [shape: f32[2,8,48], index: 9, kind: output, shape index: {}]
  %s10 = sld [smem:[#allocation0]]
  $region66: #{tpu_custom_call.1} parent=0
    _
  %s12 = ssub.s32 1, %s10
  %s13 = scalar_select 0, %s12, %s10
  $region1: #{tpu_custom_call.1} parent=0
    #allocation2 [shape = 'u8[8192]{0}', space=vmem, size = 0x2000, scoped, tag = 'input window, operand 0, single buffered']
    #allocation3 [shape = 's32[1]{0}', space=sflag, size = 0x4, scoped, tag = 'scoped memory for tpu_custom_call.1']
    #allocation4 [shape = 's32[1]{0}', space=sflag, size = 0x4, scoped, tag = 'scoped memory for tpu_custom_call.1']
    #allocation5 [shape = 'u8[49152]{0}', space=vmem, size = 0xc000, scoped, tag = 'input window, operand 1, single buffered']
    #allocation6 [shape = 's32[1]{0}', space=sflag, size = 0x4, scoped, tag = 'scoped memory for tpu_custom_call.1']
    #allocation7 [shape = 'u8[49152]{0}', space=vmem, size = 0xc000, scoped, tag = 'input window, operand 3, single buffered']
    #allocation8 [shape = 'u8[24576]{0}', space=vmem, size = 0x6000, scoped, tag = 'input window, operand 5, single buffered']
    #allocation9 [shape = 's32[1]{0}', space=sflag, size = 0x4, scoped, tag = 'scoped memory for tpu_custom_call.1']
    #allocation10 [shape = 'u8[24576]{0}', space=vmem, size = 0x6000, scoped, tag = 'input window, operand 7, single buffered']
    #allocation11 [shape = 'u8[8192]{0}', space=vmem, size = 0x2000, scoped, tag = 'output window, operand 0, single buffered']
    %14 = vsyncpa [#allocation3], 0
    %15 = vsyncpa [#allocation6], 0
    %16 = vsyncpa [#allocation9], 0
    %17 = vsyncpa [#allocation4], 0
    // Predicated region
    $region2: #{tpu_custom_call.1} parent=1 // pred_check
      _
    $region3: #{tpu_custom_call.1} parent=1 // pred_check_branch
      %19 = sbr.rel (0) target = $region5
    $region4: #{tpu_custom_call.1} parent=1 // pred_region
      %s21 = ssub.s32 256, 256
      %22 = vsyncadd [#allocation3], %s21
      %s23 = sshll.u32 [#allocation2], 4
      %s24 = int_to_ptr.vmem [resolvable:$true] %s23
      %29 = dma.hbm_to_vmem [thread:$0]  %s0, 256, %s24, [#allocation3], 128, 128, 8
    $region5: #{tpu_custom_call.1} parent=1 // pred_fallthru
      _
    // Predicated region
    $region6: #{tpu_custom_call.1} parent=1 // pred_check
      _
    $region7: #{tpu_custom_call.1} parent=1 // pred_check_branch
      %31 = sbr.rel (0) target = $region9
    $region8: #{tpu_custom_call.1} parent=1 // pred_region
      %s33 = ssub.s32 1536, 1536
      %34 = vsyncadd [#allocation6], %s33
      %s35 = sshll.u32 [#allocation5], 4
      %s36 = int_to_ptr.vmem [resolvable:$true] %s35
      %41 = dma.hbm_to_vmem [thread:$0]  %s1, 1536, %s36, [#allocation6], 128, 128, 8
    $region9: #{tpu_custom_call.1} parent=1 // pred_fallthru
      _
    // Predicated region
    $region10: #{tpu_custom_call.1} parent=1 // pred_check
      _
    $region11: #{tpu_custom_call.1} parent=1 // pred_check_branch
      %43 = sbr.rel (0) target = $region13
    $region12: #{tpu_custom_call.1} parent=1 // pred_region
      _
    $region13: #{tpu_custom_call.1} parent=1 // pred_fallthru
      _
    // Predicated region
    $region14: #{tpu_custom_call.1} parent=1 // pred_check
      _
    $region15: #{tpu_custom_call.1} parent=1 // pred_check_branch
      %45 = sbr.rel (0) target = $region17
    $region16: #{tpu_custom_call.1} parent=1 // pred_region
      %s47 = ssub.s32 1536, 1536
      %48 = vsyncadd [#allocation6], %s47
      %s49 = sshll.u32 [#allocation7], 4
      %s50 = int_to_ptr.vmem [resolvable:$true] %s49
      %55 = dma.hbm_to_vmem [thread:$0]  %s3, 1536, %s50, [#allocation6], 128, 128, 8
    $region17: #{tpu_custom_call.1} parent=1 // pred_fallthru
      _
    // Predicated region
    $region18: #{tpu_custom_call.1} parent=1 // pred_check
      _
    $region19: #{tpu_custom_call.1} parent=1 // pred_check_branch
      %57 = sbr.rel (0) target = $region21
    $region20: #{tpu_custom_call.1} parent=1 // pred_region
      _
    $region21: #{tpu_custom_call.1} parent=1 // pred_fallthru
      _
    // Predicated region
    $region22: #{tpu_custom_call.1} parent=1 // pred_check
      _
    $region23: #{tpu_custom_call.1} parent=1 // pred_check_branch
      %59 = sbr.rel (0) target = $region25
    $region24: #{tpu_custom_call.1} parent=1 // pred_region
      %s61 = ssub.s32 768, 768
      %62 = vsyncadd [#allocation9], %s61
      %s63 = sshll.u32 [#allocation8], 4
      %s64 = int_to_ptr.vmem [resolvable:$true] %s63
      %69 = dma.hbm_to_vmem [thread:$0]  %s5, 768, %s64, [#allocation9], 128, 128, 8
    $region25: #{tpu_custom_call.1} parent=1 // pred_fallthru
      _
    // Predicated region
    $region26: #{tpu_custom_call.1} parent=1 // pred_check
      _
    $region27: #{tpu_custom_call.1} parent=1 // pred_check_branch
      %71 = sbr.rel (0) target = $region29
    $region28: #{tpu_custom_call.1} parent=1 // pred_region
      _
    $region29: #{tpu_custom_call.1} parent=1 // pred_fallthru
      _
    // Predicated region
    $region30: #{tpu_custom_call.1} parent=1 // pred_check
      _
    $region31: #{tpu_custom_call.1} parent=1 // pred_check_branch
      %73 = sbr.rel (0) target = $region33
    $region32: #{tpu_custom_call.1} parent=1 // pred_region
      %s75 = ssub.s32 768, 768
      %76 = vsyncadd [#allocation9], %s75
      %s77 = sshll.u32 [#allocation10], 4
      %s78 = int_to_ptr.vmem [resolvable:$true] %s77
      %83 = dma.hbm_to_vmem [thread:$0]  %s7, 768, %s78, [#allocation9], 128, 128, 8
    $region33: #{tpu_custom_call.1} parent=1 // pred_fallthru
      _
    // Predicated region
    $region34: #{tpu_custom_call.1} parent=1 // pred_check
      _
    $region35: #{tpu_custom_call.1} parent=1 // pred_check_branch
      %85 = sbr.rel (0) target = $region37
    $region36: #{tpu_custom_call.1} parent=1 // pred_region
      _
    $region37: #{tpu_custom_call.1} parent=1 // pred_fallthru
      _
    // Predicated region
    $region38: #{tpu_custom_call.1} parent=1 // pred_check
      _
    $region39: #{tpu_custom_call.1} parent=1 // pred_check_branch
      %87 = sbr.rel (0) target = $region41
    $region40: #{tpu_custom_call.1} parent=1 // pred_region
      %88 = dma.done [#allocation3], 256
    $region41: #{tpu_custom_call.1} parent=1 // pred_fallthru
      _
    // Predicated region
    $region42: #{tpu_custom_call.1} parent=1 // pred_check
      _
    $region43: #{tpu_custom_call.1} parent=1 // pred_check_branch
      %90 = sbr.rel (0) target = $region45
    $region44: #{tpu_custom_call.1} parent=1 // pred_region
      %91 = dma.done [#allocation6], 1536
    $region45: #{tpu_custom_call.1} parent=1 // pred_fallthru
      _
    // Predicated region
    $region46: #{tpu_custom_call.1} parent=1 // pred_check
      _
    $region47: #{tpu_custom_call.1} parent=1 // pred_check_branch
      %93 = sbr.rel (0) target = $region49
    $region48: #{tpu_custom_call.1} parent=1 // pred_region
      %94 = dma.done [#allocation6], 1536
    $region49: #{tpu_custom_call.1} parent=1 // pred_fallthru
      _
    // Predicated region
    $region50: #{tpu_custom_call.1} parent=1 // pred_check
      _
    $region51: #{tpu_custom_call.1} parent=1 // pred_check_branch
      %96 = sbr.rel (0) target = $region53
    $region52: #{tpu_custom_call.1} parent=1 // pred_region
      %97 = dma.done [#allocation9], 768
    $region53: #{tpu_custom_call.1} parent=1 // pred_fallthru
      _
    // Predicated region
    $region54: #{tpu_custom_call.1} parent=1 // pred_check
      _
    $region55: #{tpu_custom_call.1} parent=1 // pred_check_branch
      %99 = sbr.rel (0) target = $region57
    $region56: #{tpu_custom_call.1} parent=1 // pred_region
      %100 = dma.done [#allocation9], 768
    $region57: #{tpu_custom_call.1} parent=1 // pred_fallthru
      _
    %v101 = vld [vmem:[#allocation2] sm:$0xff]
    %v102 = vld [vmem:[#allocation2 + $0x8] sm:$0xff]
    %v103 = vld [vmem:[#allocation8] sm:$0xff]
    %v104 = vld [vmem:[#allocation8 + $0x8] sm:$0xff]
    %v105 = vld [vmem:[#allocation8 + $0x10] sm:$0xff]
    %v106 = vld [vmem:[#allocation8 + $0x18] sm:$0xff]
    %v107 = vld [vmem:[#allocation8 + $0x20] sm:$0xff]
    %v108 = vld [vmem:[#allocation8 + $0x28] sm:$0xff]
    %v109 = vld [vmem:[%s6] sm:$0x1]
    %v111 = vlaneseq
    %v112 = vshrl.u32 %v111, 7
    %v113 = vsub.s32 0, %v112
    %v114 = vrot.slane %v109, %v113
    %vm116 = vcmask 392192
    %v118 = vsel %vm116, %v101, 0
    %v121 = vsel %vm116, %v102, 0
    %123 = vmatprep.subr.mxu0 0.0
    %124 = vmatpush1.msra.mxu0 0.0
    %125 = vmatprep.subr.mxu0 0.0
    %126 = vmatpush1.msra.mxu0 0.0
    %127 = vmatprep.subr.mxu0 0.0
    %128 = vmatpush1.msra.mxu0 0.0
    %129 = vmatprep.subr.mxu0 0.0
    %130 = vmatpush1.msra.mxu0 0.0
    %131 = vmatprep.subr.mxu0 0.0
    %132 = vmatpush1.msra.mxu0 0.0
    %133 = vmatprep.subr.mxu0 0.0
    %134 = vmatpush1.msra.mxu0 0.0
    %135 = vmatprep.subr.mxu0 0.0
    %136 = vmatpush1.msra.mxu0 0.0
    %137 = vmatprep.subr.mxu0 0.0
    %138 = vmatpush1.msra.mxu0 0.0
    %139 = vmatprep.subr.mxu0 0.0
    %140 = vmatpush1.msra.mxu0 0.0
    %141 = vmatprep.subr.mxu0 0.0
    %142 = vmatpush1.msra.mxu0 0.0
    %143 = vmatprep.subr.mxu0 0.0
    %144 = vmatpush1.msra.mxu0 %v108
    %145 = vmatprep.subr.mxu0 0.0
    %146 = vmatpush1.msra.mxu0 %v107
    %147 = vmatprep.subr.mxu0 0.0
    %148 = vmatpush1.msra.mxu0 %v106
    %149 = vmatprep.subr.mxu0 0.0
    %150 = vmatpush1.msra.mxu0 %v105
    %151 = vmatprep.subr.mxu0 0.0
    %152 = vmatpush1.msra.mxu0 %v104
    %153 = vmatprep.subr.mxu0 0.0
    %154 = vmatpush1.msra.mxu0 %v103
    %155 = vmatprep.subr.mxu0 0.0
    %156 = vmatpush2.msra.mxu0 0.0
    %157 = vmatprep.subr.mxu0 0.0
    %158 = vmatpush2.msra.mxu0 0.0
    %159 = vmatprep.subr.mxu0 0.0
    %160 = vmatpush2.msra.mxu0 0.0
    %161 = vmatprep.subr.mxu0 0.0
    %162 = vmatpush2.msra.mxu0 0.0
    %163 = vmatprep.subr.mxu0 0.0
    %164 = vmatpush2.msra.mxu0 0.0
    %165 = vmatprep.subr.mxu0 0.0
    %166 = vmatpush2.msra.mxu0 0.0
    %167 = vmatprep.subr.mxu0 0.0
    %168 = vmatpush2.msra.mxu0 0.0
    %169 = vmatprep.subr.mxu0 0.0
    %170 = vmatpush2.msra.mxu0 0.0
    %171 = vmatprep.subr.mxu0 0.0
    %172 = vmatpush2.msra.mxu0 0.0
    %173 = vmatprep.subr.mxu0 0.0
    %174 = vmatpush2.msra.mxu0 0.0
    %175 = vmatprep.subr.mxu0 0.0
    %176 = vmatpush2.msra.mxu0 0.0
    %177 = vmatprep.subr.mxu0 0.0
    %178 = vmatpush2.msra.mxu0 0.0
    %179 = vmatprep.subr.mxu0 0.0
    %180 = vmatpush2.msra.mxu0 0.0
    %181 = vmatprep.subr.mxu0 0.0
    %182 = vmatpush2.msra.mxu0 0.0
    %183 = vmatprep.subr.mxu0 0.0
    %184 = vmatpush2.msra.mxu0 0.0
    %185 = vmatprep.subr.mxu0 0.0
    %186 = vmatpush2.msra.mxu0 0.0
    %187 = vmatprep.mubr.f32.mxu0 0.0
    %188 = vmatmul.mubr.f32.gmra.mxu0 %v118
    %v189 = vpop.f32.mrf.mxu0
    %v190 = vadd.f32 %v114, %v189
    %v191 = vpop.f32.mrf.mxu0
    %192 = vmatprep.mubr.f32.mxu0 0.0
    %193 = vmatmul.mubr.f32.gmra.mxu0 %v121
    %v194 = vpop.f32.mrf.mxu0
    %v195 = vadd.f32 %v114, %v194
    %v196 = vpop.f32.mrf.mxu0
    %197 = vdwg.mxu0
    %v198 = vld [vmem:[#allocation5] sm:$0xff]
    %v199 = vld [vmem:[#allocation5 + $0x8] sm:$0xff]
    %v200 = vld [vmem:[#allocation5 + $0x10] sm:$0xff]
    %v201 = vld [vmem:[#allocation5 + $0x18] sm:$0xff]
    %v202 = vld [vmem:[#allocation5 + $0x20] sm:$0xff]
    %v203 = vld [vmem:[#allocation5 + $0x28] sm:$0xff]
    %v204 = vld [vmem:[%s2] sm:$0x1]
    %v206 = vlaneseq
    %v207 = vshrl.u32 %v206, 7
    %v208 = vsub.s32 0, %v207
    %v209 = vrot.slane %v204, %v208
    %211 = vmatprep.subr.mxu0 0.0
    %212 = vmatpush1.msra.mxu0 0.0
    %213 = vmatprep.subr.mxu0 0.0
    %214 = vmatpush1.msra.mxu0 0.0
    %215 = vmatprep.subr.mxu0 0.0
    %216 = vmatpush1.msra.mxu0 0.0
    %217 = vmatprep.subr.mxu0 0.0
    %218 = vmatpush1.msra.mxu0 0.0
    %219 = vmatprep.subr.mxu0 0.0
    %220 = vmatpush1.msra.mxu0 0.0
    %221 = vmatprep.subr.mxu0 0.0
    %222 = vmatpush1.msra.mxu0 0.0
    %223 = vmatprep.subr.mxu0 0.0
    %224 = vmatpush1.msra.mxu0 0.0
    %225 = vmatprep.subr.mxu0 0.0
    %226 = vmatpush1.msra.mxu0 0.0
    %227 = vmatprep.subr.mxu0 0.0
    %228 = vmatpush1.msra.mxu0 0.0
    %229 = vmatprep.subr.mxu0 0.0
    %230 = vmatpush1.msra.mxu0 0.0
    %231 = vmatprep.subr.mxu0 0.0
    %232 = vmatpush1.msra.mxu0 %v203
    %233 = vmatprep.subr.mxu0 0.0
    %234 = vmatpush1.msra.mxu0 %v202
    %235 = vmatprep.subr.mxu0 0.0
    %236 = vmatpush1.msra.mxu0 %v201
    %237 = vmatprep.subr.mxu0 0.0
    %238 = vmatpush1.msra.mxu0 %v200
    %239 = vmatprep.subr.mxu0 0.0
    %240 = vmatpush1.msra.mxu0 %v199
    %241 = vmatprep.subr.mxu0 0.0
    %242 = vmatpush1.msra.mxu0 %v198
    %243 = vmatprep.subr.mxu0 0.0
    %244 = vmatpush2.msra.mxu0 0.0
    %245 = vmatprep.subr.mxu0 0.0
    %246 = vmatpush2.msra.mxu0 0.0
    %247 = vmatprep.subr.mxu0 0.0
    %248 = vmatpush2.msra.mxu0 0.0
    %249 = vmatprep.subr.mxu0 0.0
    %250 = vmatpush2.msra.mxu0 0.0
    %251 = vmatprep.subr.mxu0 0.0
    %252 = vmatpush2.msra.mxu0 0.0
    %253 = vmatprep.subr.mxu0 0.0
    %254 = vmatpush2.msra.mxu0 0.0
    %255 = vmatprep.subr.mxu0 0.0
    %256 = vmatpush2.msra.mxu0 0.0
    %257 = vmatprep.subr.mxu0 0.0
    %258 = vmatpush2.msra.mxu0 0.0
    %259 = vmatprep.subr.mxu0 0.0
    %260 = vmatpush2.msra.mxu0 0.0
    %261 = vmatprep.subr.mxu0 0.0
    %262 = vmatpush2.msra.mxu0 0.0
    %263 = vmatprep.subr.mxu0 0.0
    %264 = vmatpush2.msra.mxu0 0.0
    %265 = vmatprep.subr.mxu0 0.0
    %266 = vmatpush2.msra.mxu0 0.0
    %267 = vmatprep.subr.mxu0 0.0
    %268 = vmatpush2.msra.mxu0 0.0
    %269 = vmatprep.subr.mxu0 0.0
    %270 = vmatpush2.msra.mxu0 0.0
    %271 = vmatprep.subr.mxu0 0.0
    %272 = vmatpush2.msra.mxu0 0.0
    %273 = vmatprep.subr.mxu0 0.0
    %274 = vmatpush2.msra.mxu0 0.0
    %275 = vmatprep.mubr.f32.mxu0 0.0
    %276 = vmatmul.mubr.f32.gmra.mxu0 %v118
    %v277 = vpop.f32.mrf.mxu0
    %v278 = vadd.f32 %v209, %v277
    %v279 = vpop.f32.mrf.mxu0
    %280 = vmatprep.mubr.f32.mxu0 0.0
    %281 = vmatmul.mubr.f32.gmra.mxu0 %v121
    %v282 = vpop.f32.mrf.mxu0
    %v283 = vadd.f32 %v209, %v282
    %v284 = vpop.f32.mrf.mxu0
    %285 = vdwg.mxu0
    %v286 = vld [vmem:[#allocation7] sm:$0xff]
    %v287 = vld [vmem:[#allocation7 + $0x8] sm:$0xff]
    %v288 = vld [vmem:[#allocation7 + $0x10] sm:$0xff]
    %v289 = vld [vmem:[#allocation7 + $0x18] sm:$0xff]
    %v290 = vld [vmem:[#allocation7 + $0x20] sm:$0xff]
    %v291 = vld [vmem:[#allocation7 + $0x28] sm:$0xff]
    %v292 = vld [vmem:[%s4] sm:$0x1]
    %v294 = vlaneseq
    %v295 = vshrl.u32 %v294, 7
    %v296 = vsub.s32 0, %v295
    %v297 = vrot.slane %v292, %v296
    %299 = vmatprep.subr.mxu0 0.0
    %300 = vmatpush1.msra.mxu0 0.0
    %301 = vmatprep.subr.mxu0 0.0
    %302 = vmatpush1.msra.mxu0 0.0
    %303 = vmatprep.subr.mxu0 0.0
    %304 = vmatpush1.msra.mxu0 0.0
    %305 = vmatprep.subr.mxu0 0.0
    %306 = vmatpush1.msra.mxu0 0.0
    %307 = vmatprep.subr.mxu0 0.0
    %308 = vmatpush1.msra.mxu0 0.0
    %309 = vmatprep.subr.mxu0 0.0
    %310 = vmatpush1.msra.mxu0 0.0
    %311 = vmatprep.subr.mxu0 0.0
    %312 = vmatpush1.msra.mxu0 0.0
    %313 = vmatprep.subr.mxu0 0.0
    %314 = vmatpush1.msra.mxu0 0.0
    %315 = vmatprep.subr.mxu0 0.0
    %316 = vmatpush1.msra.mxu0 0.0
    %317 = vmatprep.subr.mxu0 0.0
    %318 = vmatpush1.msra.mxu0 0.0
    %319 = vmatprep.subr.mxu0 0.0
    %320 = vmatpush1.msra.mxu0 %v291
    %321 = vmatprep.subr.mxu0 0.0
    %322 = vmatpush1.msra.mxu0 %v290
    %323 = vmatprep.subr.mxu0 0.0
    %324 = vmatpush1.msra.mxu0 %v289
    %325 = vmatprep.subr.mxu0 0.0
    %326 = vmatpush1.msra.mxu0 %v288
    %327 = vmatprep.subr.mxu0 0.0
    %328 = vmatpush1.msra.mxu0 %v287
    %329 = vmatprep.subr.mxu0 0.0
    %330 = vmatpush1.msra.mxu0 %v286
    %331 = vmatprep.subr.mxu0 0.0
    %332 = vmatpush2.msra.mxu0 0.0
    %333 = vmatprep.subr.mxu0 0.0
    %334 = vmatpush2.msra.mxu0 0.0
    %335 = vmatprep.subr.mxu0 0.0
    %336 = vmatpush2.msra.mxu0 0.0
    %337 = vmatprep.subr.mxu0 0.0
    %338 = vmatpush2.msra.mxu0 0.0
    %339 = vmatprep.subr.mxu0 0.0
    %340 = vmatpush2.msra.mxu0 0.0
    %341 = vmatprep.subr.mxu0 0.0
    %342 = vmatpush2.msra.mxu0 0.0
    %343 = vmatprep.subr.mxu0 0.0
    %344 = vmatpush2.msra.mxu0 0.0
    %345 = vmatprep.subr.mxu0 0.0
    %346 = vmatpush2.msra.mxu0 0.0
    %347 = vmatprep.subr.mxu0 0.0
    %348 = vmatpush2.msra.mxu0 0.0
    %349 = vmatprep.subr.mxu0 0.0
    %350 = vmatpush2.msra.mxu0 0.0
    %351 = vmatprep.subr.mxu0 0.0
    %352 = vmatpush2.msra.mxu0 0.0
    %353 = vmatprep.subr.mxu0 0.0
    %354 = vmatpush2.msra.mxu0 0.0
    %355 = vmatprep.subr.mxu0 0.0
    %356 = vmatpush2.msra.mxu0 0.0
    %357 = vmatprep.subr.mxu0 0.0
    %358 = vmatpush2.msra.mxu0 0.0
    %359 = vmatprep.subr.mxu0 0.0
    %360 = vmatpush2.msra.mxu0 0.0
    %361 = vmatprep.subr.mxu0 0.0
    %362 = vmatpush2.msra.mxu0 0.0
    %363 = vmatprep.mubr.f32.mxu0 0.0
    %364 = vmatmul.mubr.f32.gmra.mxu0 %v118
    %v365 = vpop.f32.mrf.mxu0
    %v366 = vadd.f32 %v297, %v365
    %v367 = vpop.f32.mrf.mxu0
    %368 = vmatprep.mubr.f32.mxu0 0.0
    %369 = vmatmul.mubr.f32.gmra.mxu0 %v121
    %v370 = vpop.f32.mrf.mxu0
    %v371 = vadd.f32 %v297, %v370
    %v372 = vpop.f32.mrf.mxu0
    %373 = vdwg.mxu0
    %v376 = vcombine.high %v278, %v278
    %v378 = vunpack.c.l.s4 1966171168
    %v379 = vunpack.c.0.s8 %v378
    %v380 = vlaneseq
    %v381 = vshrl.u32 %v380, 7
    %v382 = vsub.s32 %v379, %v381
    %v383 = vrot.slane %v278, %v382
    %v385 = vunpack.c.l.s4 1966171168
    %v386 = vunpack.c.0.s8 %v385
    %v387 = vlaneseq
    %v388 = vshrl.u32 %v387, 7
    %v389 = vsub.s32 %v386, %v388
    %v390 = vrot.slane %v376, %v389
    %v391 = vcombine.high %v383, %v383
    %v392 = vcombine.high %v390, %v390
    %v394 = vunpack.c.l.s4 1966171168
    %v395 = vunpack.c.0.s8 %v394
    %v396 = vlaneseq
    %v397 = vshrl.u32 %v396, 7
    %v398 = vsub.s32 %v395, %v397
    %v399 = vrot.slane %v383, %v398
    %v401 = vunpack.c.l.s4 1966171168
    %v402 = vunpack.c.0.s8 %v401
    %v403 = vlaneseq
    %v404 = vshrl.u32 %v403, 7
    %v405 = vsub.s32 %v402, %v404
    %v406 = vrot.slane %v390, %v405
    %v408 = vunpack.c.l.s4 1966171168
    %v409 = vunpack.c.0.s8 %v408
    %v410 = vlaneseq
    %v411 = vshrl.u32 %v410, 7
    %v412 = vsub.s32 %v409, %v411
    %v413 = vrot.slane %v391, %v412
    %v415 = vunpack.c.l.s4 1966171168
    %v416 = vunpack.c.0.s8 %v415
    %v417 = vlaneseq
    %v418 = vshrl.u32 %v417, 7
    %v419 = vsub.s32 %v416, %v418
    %v420 = vrot.slane %v392, %v419
    %v421 = vcombine.high %v399, %v399
    %v422 = vcombine.high %v406, %v406
    %v423 = vcombine.high %v413, %v413
    %v424 = vcombine.high %v420, %v420
    %v425 = vcombine.high %v283, %v283
    %v427 = vunpack.c.l.s4 1966171168
    %v428 = vunpack.c.0.s8 %v427
    %v429 = vlaneseq
    %v430 = vshrl.u32 %v429, 7
    %v431 = vsub.s32 %v428, %v430
    %v432 = vrot.slane %v283, %v431
    %v434 = vunpack.c.l.s4 1966171168
    %v435 = vunpack.c.0.s8 %v434
    %v436 = vlaneseq
    %v437 = vshrl.u32 %v436, 7
    %v438 = vsub.s32 %v435, %v437
    %v439 = vrot.slane %v425, %v438
    %v440 = vcombine.high %v432, %v432
    %v441 = vcombine.high %v439, %v439
    %v443 = vunpack.c.l.s4 1966171168
    %v444 = vunpack.c.0.s8 %v443
    %v445 = vlaneseq
    %v446 = vshrl.u32 %v445, 7
    %v447 = vsub.s32 %v444, %v446
    %v448 = vrot.slane %v432, %v447
    %v450 = vunpack.c.l.s4 1966171168
    %v451 = vunpack.c.0.s8 %v450
    %v452 = vlaneseq
    %v453 = vshrl.u32 %v452, 7
    %v454 = vsub.s32 %v451, %v453
    %v455 = vrot.slane %v439, %v454
    %v457 = vunpack.c.l.s4 1966171168
    %v458 = vunpack.c.0.s8 %v457
    %v459 = vlaneseq
    %v460 = vshrl.u32 %v459, 7
    %v461 = vsub.s32 %v458, %v460
    %v462 = vrot.slane %v440, %v461
    %v464 = vunpack.c.l.s4 1966171168
    %v465 = vunpack.c.0.s8 %v464
    %v466 = vlaneseq
    %v467 = vshrl.u32 %v466, 7
    %v468 = vsub.s32 %v465, %v467
    %v469 = vrot.slane %v441, %v468
    %v470 = vcombine.high %v448, %v448
    %v471 = vcombine.high %v455, %v455
    %v472 = vcombine.high %v462, %v462
    %v473 = vcombine.high %v469, %v469
    %v474 = vlaneseq
    %v475 = vshrl.u32 %v474, 7
    %v476 = vsub.s32 0, %v475
    %v477 = vrot.slane %v399, %v476
    %v478 = vlaneseq
    %v479 = vshrl.u32 %v478, 7
    %v480 = vsub.s32 0, %v479
    %v481 = vrot.slane %v413, %v480
    %v482 = vlaneseq
    %v483 = vshrl.u32 %v482, 7
    %v484 = vsub.s32 0, %v483
    %v485 = vrot.slane %v421, %v484
    %v486 = vlaneseq
    %v487 = vshrl.u32 %v486, 7
    %v488 = vsub.s32 0, %v487
    %v489 = vrot.slane %v423, %v488
    %v490 = vlaneseq
    %v491 = vshrl.u32 %v490, 7
    %v492 = vsub.s32 0, %v491
    %v493 = vrot.slane %v406, %v492
    %v494 = vlaneseq
    %v495 = vshrl.u32 %v494, 7
    %v496 = vsub.s32 0, %v495
    %v497 = vrot.slane %v420, %v496
    %v498 = vlaneseq
    %v499 = vshrl.u32 %v498, 7
    %v500 = vsub.s32 0, %v499
    %v501 = vrot.slane %v422, %v500
    %v502 = vlaneseq
    %v503 = vshrl.u32 %v502, 7
    %v504 = vsub.s32 0, %v503
    %v505 = vrot.slane %v424, %v504
    %v506 = vlaneseq
    %v507 = vshrl.u32 %v506, 7
    %v508 = vsub.s32 0, %v507
    %v509 = vrot.slane %v448, %v508
    %v510 = vlaneseq
    %v511 = vshrl.u32 %v510, 7
    %v512 = vsub.s32 0, %v511
    %v513 = vrot.slane %v462, %v512
    %v514 = vlaneseq
    %v515 = vshrl.u32 %v514, 7
    %v516 = vsub.s32 0, %v515
    %v517 = vrot.slane %v470, %v516
    %v518 = vlaneseq
    %v519 = vshrl.u32 %v518, 7
    %v520 = vsub.s32 0, %v519
    %v521 = vrot.slane %v472, %v520
    %v522 = vlaneseq
    %v523 = vshrl.u32 %v522, 7
    %v524 = vsub.s32 0, %v523
    %v525 = vrot.slane %v455, %v524
    %v526 = vlaneseq
    %v527 = vshrl.u32 %v526, 7
    %v528 = vsub.s32 0, %v527
    %v529 = vrot.slane %v469, %v528
    %v530 = vlaneseq
    %v531 = vshrl.u32 %v530, 7
    %v532 = vsub.s32 0, %v531
    %v533 = vrot.slane %v471, %v532
    %v534 = vlaneseq
    %v535 = vshrl.u32 %v534, 7
    %v536 = vsub.s32 0, %v535
    %v537 = vrot.slane %v473, %v536
    %v554 = vmul.f32 %v477, %v366
    %v555 = vmul.f32 %v481, %v366
    %v556 = vmul.f32 %v485, %v366
    %v557 = vmul.f32 %v489, %v366
    %v558 = vmul.f32 %v493, %v366
    %v559 = vmul.f32 %v497, %v366
    %v560 = vmul.f32 %v501, %v366
    %v561 = vmul.f32 %v505, %v366
    %v562 = vmul.f32 %v509, %v371
    %v563 = vmul.f32 %v513, %v371
    %v564 = vmul.f32 %v517, %v371
    %v565 = vmul.f32 %v521, %v371
    %v566 = vmul.f32 %v525, %v371
    %v567 = vmul.f32 %v529, %v371
    %v568 = vmul.f32 %v533, %v371
    %v569 = vmul.f32 %v537, %v371
    %s570 = scalar_lea.vmem [#allocation5], 48
    %v571 = vld [vmem:[%s570] sm:$0xff]
    %v572 = vld [vmem:[%s570 + $0x8] sm:$0xff]
    %v573 = vld [vmem:[%s570 + $0x10] sm:$0xff]
    %v574 = vld [vmem:[%s570 + $0x18] sm:$0xff]
    %v575 = vld [vmem:[%s570 + $0x20] sm:$0xff]
    %v576 = vld [vmem:[%s570 + $0x28] sm:$0xff]
    %s577 = scalar_lea.vmem %s2, 1
    %v578 = vld [vmem:[%s577] sm:$0x1]
    %v580 = vlaneseq
    %v581 = vshrl.u32 %v580, 7
    %v582 = vsub.s32 0, %v581
    %v583 = vrot.slane %v578, %v582
    %585 = vmatprep.subr.mxu0 0.0
    %586 = vmatpush1.msra.mxu0 0.0
    %587 = vmatprep.subr.mxu0 0.0
    %588 = vmatpush1.msra.mxu0 0.0
    %589 = vmatprep.subr.mxu0 0.0
    %590 = vmatpush1.msra.mxu0 0.0
    %591 = vmatprep.subr.mxu0 0.0
    %592 = vmatpush1.msra.mxu0 0.0
    %593 = vmatprep.subr.mxu0 0.0
    %594 = vmatpush1.msra.mxu0 0.0
    %595 = vmatprep.subr.mxu0 0.0
    %596 = vmatpush1.msra.mxu0 0.0
    %597 = vmatprep.subr.mxu0 0.0
    %598 = vmatpush1.msra.mxu0 0.0
    %599 = vmatprep.subr.mxu0 0.0
    %600 = vmatpush1.msra.mxu0 0.0
    %601 = vmatprep.subr.mxu0 0.0
    %602 = vmatpush1.msra.mxu0 0.0
    %603 = vmatprep.subr.mxu0 0.0
    %604 = vmatpush1.msra.mxu0 0.0
    %605 = vmatprep.subr.mxu0 0.0
    %606 = vmatpush1.msra.mxu0 %v576
    %607 = vmatprep.subr.mxu0 0.0
    %608 = vmatpush1.msra.mxu0 %v575
    %609 = vmatprep.subr.mxu0 0.0
    %610 = vmatpush1.msra.mxu0 %v574
    %611 = vmatprep.subr.mxu0 0.0
    %612 = vmatpush1.msra.mxu0 %v573
    %613 = vmatprep.subr.mxu0 0.0
    %614 = vmatpush1.msra.mxu0 %v572
    %615 = vmatprep.subr.mxu0 0.0
    %616 = vmatpush1.msra.mxu0 %v571
    %617 = vmatprep.subr.mxu0 0.0
    %618 = vmatpush2.msra.mxu0 0.0
    %619 = vmatprep.subr.mxu0 0.0
    %620 = vmatpush2.msra.mxu0 0.0
    %621 = vmatprep.subr.mxu0 0.0
    %622 = vmatpush2.msra.mxu0 0.0
    %623 = vmatprep.subr.mxu0 0.0
    %624 = vmatpush2.msra.mxu0 0.0
    %625 = vmatprep.subr.mxu0 0.0
    %626 = vmatpush2.msra.mxu0 0.0
    %627 = vmatprep.subr.mxu0 0.0
    %628 = vmatpush2.msra.mxu0 0.0
    %629 = vmatprep.subr.mxu0 0.0
    %630 = vmatpush2.msra.mxu0 0.0
    %631 = vmatprep.subr.mxu0 0.0
    %632 = vmatpush2.msra.mxu0 0.0
    %633 = vmatprep.subr.mxu0 0.0
    %634 = vmatpush2.msra.mxu0 0.0
    %635 = vmatprep.subr.mxu0 0.0
    %636 = vmatpush2.msra.mxu0 0.0
    %637 = vmatprep.subr.mxu0 0.0
    %638 = vmatpush2.msra.mxu0 0.0
    %639 = vmatprep.subr.mxu0 0.0
    %640 = vmatpush2.msra.mxu0 0.0
    %641 = vmatprep.subr.mxu0 0.0
    %642 = vmatpush2.msra.mxu0 0.0
    %643 = vmatprep.subr.mxu0 0.0
    %644 = vmatpush2.msra.mxu0 0.0
    %645 = vmatprep.subr.mxu0 0.0
    %646 = vmatpush2.msra.mxu0 0.0
    %647 = vmatprep.subr.mxu0 0.0
    %648 = vmatpush2.msra.mxu0 0.0
    %649 = vmatprep.mubr.f32.mxu0 0.0
    %650 = vmatmul.mubr.f32.gmra.mxu0 %v118
    %v651 = vpop.f32.mrf.mxu0
    %v652 = vadd.f32 %v583, %v651
    %v653 = vpop.f32.mrf.mxu0
    %654 = vmatprep.mubr.f32.mxu0 0.0
    %655 = vmatmul.mubr.f32.gmra.mxu0 %v121
    %v656 = vpop.f32.mrf.mxu0
    %v657 = vadd.f32 %v583, %v656
    %v658 = vpop.f32.mrf.mxu0
    %659 = vdwg.mxu0
    %s660 = scalar_lea.vmem [#allocation7], 48
    %v661 = vld [vmem:[%s660] sm:$0xff]
    %v662 = vld [vmem:[%s660 + $0x8] sm:$0xff]
    %v663 = vld [vmem:[%s660 + $0x10] sm:$0xff]
    %v664 = vld [vmem:[%s660 + $0x18] sm:$0xff]
    %v665 = vld [vmem:[%s660 + $0x20] sm:$0xff]
    %v666 = vld [vmem:[%s660 + $0x28] sm:$0xff]
    %s667 = scalar_lea.vmem %s4, 1
    %v668 = vld [vmem:[%s667] sm:$0x1]
    %v670 = vlaneseq
    %v671 = vshrl.u32 %v670, 7
    %v672 = vsub.s32 0, %v671
    %v673 = vrot.slane %v668, %v672
    %675 = vmatprep.subr.mxu0 0.0
    %676 = vmatpush1.msra.mxu0 0.0
    %677 = vmatprep.subr.mxu0 0.0
    %678 = vmatpush1.msra.mxu0 0.0
    %679 = vmatprep.subr.mxu0 0.0
    %680 = vmatpush1.msra.mxu0 0.0
    %681 = vmatprep.subr.mxu0 0.0
    %682 = vmatpush1.msra.mxu0 0.0
    %683 = vmatprep.subr.mxu0 0.0
    %684 = vmatpush1.msra.mxu0 0.0
    %685 = vmatprep.subr.mxu0 0.0
    %686 = vmatpush1.msra.mxu0 0.0
    %687 = vmatprep.subr.mxu0 0.0
    %688 = vmatpush1.msra.mxu0 0.0
    %689 = vmatprep.subr.mxu0 0.0
    %690 = vmatpush1.msra.mxu0 0.0
    %691 = vmatprep.subr.mxu0 0.0
    %692 = vmatpush1.msra.mxu0 0.0
    %693 = vmatprep.subr.mxu0 0.0
    %694 = vmatpush1.msra.mxu0 0.0
    %695 = vmatprep.subr.mxu0 0.0
    %696 = vmatpush1.msra.mxu0 %v666
    %697 = vmatprep.subr.mxu0 0.0
    %698 = vmatpush1.msra.mxu0 %v665
    %699 = vmatprep.subr.mxu0 0.0
    %700 = vmatpush1.msra.mxu0 %v664
    %701 = vmatprep.subr.mxu0 0.0
    %702 = vmatpush1.msra.mxu0 %v663
    %703 = vmatprep.subr.mxu0 0.0
    %704 = vmatpush1.msra.mxu0 %v662
    %705 = vmatprep.subr.mxu0 0.0
    %706 = vmatpush1.msra.mxu0 %v661
    %707 = vmatprep.subr.mxu0 0.0
    %708 = vmatpush2.msra.mxu0 0.0
    %709 = vmatprep.subr.mxu0 0.0
    %710 = vmatpush2.msra.mxu0 0.0
    %711 = vmatprep.subr.mxu0 0.0
    %712 = vmatpush2.msra.mxu0 0.0
    %713 = vmatprep.subr.mxu0 0.0
    %714 = vmatpush2.msra.mxu0 0.0
    %715 = vmatprep.subr.mxu0 0.0
    %716 = vmatpush2.msra.mxu0 0.0
    %717 = vmatprep.subr.mxu0 0.0
    %718 = vmatpush2.msra.mxu0 0.0
    %719 = vmatprep.subr.mxu0 0.0
    %720 = vmatpush2.msra.mxu0 0.0
    %721 = vmatprep.subr.mxu0 0.0
    %722 = vmatpush2.msra.mxu0 0.0
    %723 = vmatprep.subr.mxu0 0.0
    %724 = vmatpush2.msra.mxu0 0.0
    %725 = vmatprep.subr.mxu0 0.0
    %726 = vmatpush2.msra.mxu0 0.0
    %727 = vmatprep.subr.mxu0 0.0
    %728 = vmatpush2.msra.mxu0 0.0
    %729 = vmatprep.subr.mxu0 0.0
    %730 = vmatpush2.msra.mxu0 0.0
    %731 = vmatprep.subr.mxu0 0.0
    %732 = vmatpush2.msra.mxu0 0.0
    %733 = vmatprep.subr.mxu0 0.0
    %734 = vmatpush2.msra.mxu0 0.0
    %735 = vmatprep.subr.mxu0 0.0
    %736 = vmatpush2.msra.mxu0 0.0
    %737 = vmatprep.subr.mxu0 0.0
    %738 = vmatpush2.msra.mxu0 0.0
    %739 = vmatprep.mubr.f32.mxu0 0.0
    %740 = vmatmul.mubr.f32.gmra.mxu0 %v118
    %v741 = vpop.f32.mrf.mxu0
    %v742 = vadd.f32 %v673, %v741
    %v743 = vpop.f32.mrf.mxu0
    %744 = vmatprep.mubr.f32.mxu0 0.0
    %745 = vmatmul.mubr.f32.gmra.mxu0 %v121
    %v746 = vpop.f32.mrf.mxu0
    %v747 = vadd.f32 %v673, %v746
    %v748 = vpop.f32.mrf.mxu0
    %749 = vdwg.mxu0
    %v752 = vcombine.high %v652, %v652
    %v754 = vunpack.c.l.s4 1966171168
    %v755 = vunpack.c.0.s8 %v754
    %v756 = vlaneseq
    %v757 = vshrl.u32 %v756, 7
    %v758 = vsub.s32 %v755, %v757
    %v759 = vrot.slane %v652, %v758
    %v761 = vunpack.c.l.s4 1966171168
    %v762 = vunpack.c.0.s8 %v761
    %v763 = vlaneseq
    %v764 = vshrl.u32 %v763, 7
    %v765 = vsub.s32 %v762, %v764
    %v766 = vrot.slane %v752, %v765
    %v767 = vcombine.high %v759, %v759
    %v768 = vcombine.high %v766, %v766
    %v770 = vunpack.c.l.s4 1966171168
    %v771 = vunpack.c.0.s8 %v770
    %v772 = vlaneseq
    %v773 = vshrl.u32 %v772, 7
    %v774 = vsub.s32 %v771, %v773
    %v775 = vrot.slane %v759, %v774
    %v777 = vunpack.c.l.s4 1966171168
    %v778 = vunpack.c.0.s8 %v777
    %v779 = vlaneseq
    %v780 = vshrl.u32 %v779, 7
    %v781 = vsub.s32 %v778, %v780
    %v782 = vrot.slane %v766, %v781
    %v784 = vunpack.c.l.s4 1966171168
    %v785 = vunpack.c.0.s8 %v784
    %v786 = vlaneseq
    %v787 = vshrl.u32 %v786, 7
    %v788 = vsub.s32 %v785, %v787
    %v789 = vrot.slane %v767, %v788
    %v791 = vunpack.c.l.s4 1966171168
    %v792 = vunpack.c.0.s8 %v791
    %v793 = vlaneseq
    %v794 = vshrl.u32 %v793, 7
    %v795 = vsub.s32 %v792, %v794
    %v796 = vrot.slane %v768, %v795
    %v797 = vcombine.high %v775, %v775
    %v798 = vcombine.high %v782, %v782
    %v799 = vcombine.high %v789, %v789
    %v800 = vcombine.high %v796, %v796
    %v801 = vcombine.high %v657, %v657
    %v803 = vunpack.c.l.s4 1966171168
    %v804 = vunpack.c.0.s8 %v803
    %v805 = vlaneseq
    %v806 = vshrl.u32 %v805, 7
    %v807 = vsub.s32 %v804, %v806
    %v808 = vrot.slane %v657, %v807
    %v810 = vunpack.c.l.s4 1966171168
    %v811 = vunpack.c.0.s8 %v810
    %v812 = vlaneseq
    %v813 = vshrl.u32 %v812, 7
    %v814 = vsub.s32 %v811, %v813
    %v815 = vrot.slane %v801, %v814
    %v816 = vcombine.high %v808, %v808
    %v817 = vcombine.high %v815, %v815
    %v819 = vunpack.c.l.s4 1966171168
    %v820 = vunpack.c.0.s8 %v819
    %v821 = vlaneseq
    %v822 = vshrl.u32 %v821, 7
    %v823 = vsub.s32 %v820, %v822
    %v824 = vrot.slane %v808, %v823
    %v826 = vunpack.c.l.s4 1966171168
    %v827 = vunpack.c.0.s8 %v826
    %v828 = vlaneseq
    %v829 = vshrl.u32 %v828, 7
    %v830 = vsub.s32 %v827, %v829
    %v831 = vrot.slane %v815, %v830
    %v833 = vunpack.c.l.s4 1966171168
    %v834 = vunpack.c.0.s8 %v833
    %v835 = vlaneseq
    %v836 = vshrl.u32 %v835, 7
    %v837 = vsub.s32 %v834, %v836
    %v838 = vrot.slane %v816, %v837
    %v840 = vunpack.c.l.s4 1966171168
    %v841 = vunpack.c.0.s8 %v840
    %v842 = vlaneseq
    %v843 = vshrl.u32 %v842, 7
    %v844 = vsub.s32 %v841, %v843
    %v845 = vrot.slane %v817, %v844
    %v846 = vcombine.high %v824, %v824
    %v847 = vcombine.high %v831, %v831
    %v848 = vcombine.high %v838, %v838
    %v849 = vcombine.high %v845, %v845
    %v850 = vlaneseq
    %v851 = vshrl.u32 %v850, 7
    %v852 = vsub.s32 0, %v851
    %v853 = vrot.slane %v775, %v852
    %v854 = vlaneseq
    %v855 = vshrl.u32 %v854, 7
    %v856 = vsub.s32 0, %v855
    %v857 = vrot.slane %v789, %v856
    %v858 = vlaneseq
    %v859 = vshrl.u32 %v858, 7
    %v860 = vsub.s32 0, %v859
    %v861 = vrot.slane %v797, %v860
    %v862 = vlaneseq
    %v863 = vshrl.u32 %v862, 7
    %v864 = vsub.s32 0, %v863
    %v865 = vrot.slane %v799, %v864
    %v866 = vlaneseq
    %v867 = vshrl.u32 %v866, 7
    %v868 = vsub.s32 0, %v867
    %v869 = vrot.slane %v782, %v868
    %v870 = vlaneseq
    %v871 = vshrl.u32 %v870, 7
    %v872 = vsub.s32 0, %v871
    %v873 = vrot.slane %v796, %v872
    %v874 = vlaneseq
    %v875 = vshrl.u32 %v874, 7
    %v876 = vsub.s32 0, %v875
    %v877 = vrot.slane %v798, %v876
    %v878 = vlaneseq
    %v879 = vshrl.u32 %v878, 7
    %v880 = vsub.s32 0, %v879
    %v881 = vrot.slane %v800, %v880
    %v882 = vlaneseq
    %v883 = vshrl.u32 %v882, 7
    %v884 = vsub.s32 0, %v883
    %v885 = vrot.slane %v824, %v884
    %v886 = vlaneseq
    %v887 = vshrl.u32 %v886, 7
    %v888 = vsub.s32 0, %v887
    %v889 = vrot.slane %v838, %v888
    %v890 = vlaneseq
    %v891 = vshrl.u32 %v890, 7
    %v892 = vsub.s32 0, %v891
    %v893 = vrot.slane %v846, %v892
    %v894 = vlaneseq
    %v895 = vshrl.u32 %v894, 7
    %v896 = vsub.s32 0, %v895
    %v897 = vrot.slane %v848, %v896
    %v898 = vlaneseq
    %v899 = vshrl.u32 %v898, 7
    %v900 = vsub.s32 0, %v899
    %v901 = vrot.slane %v831, %v900
    %v902 = vlaneseq
    %v903 = vshrl.u32 %v902, 7
    %v904 = vsub.s32 0, %v903
    %v905 = vrot.slane %v845, %v904
    %v906 = vlaneseq
    %v907 = vshrl.u32 %v906, 7
    %v908 = vsub.s32 0, %v907
    %v909 = vrot.slane %v847, %v908
    %v910 = vlaneseq
    %v911 = vshrl.u32 %v910, 7
    %v912 = vsub.s32 0, %v911
    %v913 = vrot.slane %v849, %v912
    %v930 = vmul.f32 %v853, %v742
    %v931 = vmul.f32 %v857, %v742
    %v932 = vmul.f32 %v861, %v742
    %v933 = vmul.f32 %v865, %v742
    %v934 = vmul.f32 %v869, %v742
    %v935 = vmul.f32 %v873, %v742
    %v936 = vmul.f32 %v877, %v742
    %v937 = vmul.f32 %v881, %v742
    %v938 = vmul.f32 %v885, %v747
    %v939 = vmul.f32 %v889, %v747
    %v940 = vmul.f32 %v893, %v747
    %v941 = vmul.f32 %v897, %v747
    %v942 = vmul.f32 %v901, %v747
    %v943 = vmul.f32 %v905, %v747
    %v944 = vmul.f32 %v909, %v747
    %v945 = vmul.f32 %v913, %v747
    %v946 = vadd.f32 %v554, %v930
    %v947 = vadd.f32 %v555, %v931
    %v948 = vadd.f32 %v556, %v932
    %v949 = vadd.f32 %v557, %v933
    %v950 = vadd.f32 %v558, %v934
    %v951 = vadd.f32 %v559, %v935
    %v952 = vadd.f32 %v560, %v936
    %v953 = vadd.f32 %v561, %v937
    %v954 = vadd.f32 %v562, %v938
    %v955 = vadd.f32 %v563, %v939
    %v956 = vadd.f32 %v564, %v940
    %v957 = vadd.f32 %v565, %v941
    %v958 = vadd.f32 %v566, %v942
    %v959 = vadd.f32 %v567, %v943
    %v960 = vadd.f32 %v568, %v944
    %v961 = vadd.f32 %v569, %v945
    %v962 = vsel %vm116, %v946, -inf
    %v963 = vrot.slane %v962, 4
    %v964 = vmax.f32 %v962, %v963
    %v965 = vrot.slane %v964, 2
    %v966 = vmax.f32 %v964, %v965
    %v967 = vrot.slane %v966, 1
    %v968 = vmax.f32 %v966, %v967
    %v969 = vsel %vm116, %v947, -inf
    %v970 = vrot.slane %v969, 4
    %v971 = vmax.f32 %v969, %v970
    %v972 = vrot.slane %v971, 2
    %v973 = vmax.f32 %v971, %v972
    %v974 = vrot.slane %v973, 1
    %v975 = vmax.f32 %v973, %v974
    %v976 = vsel %vm116, %v948, -inf
    %v977 = vrot.slane %v976, 4
    %v978 = vmax.f32 %v976, %v977
    %v979 = vrot.slane %v978, 2
    %v980 = vmax.f32 %v978, %v979
    %v981 = vrot.slane %v980, 1
    %v982 = vmax.f32 %v980, %v981
    %v983 = vsel %vm116, %v949, -inf
    %v984 = vrot.slane %v983, 4
    %v985 = vmax.f32 %v983, %v984
    %v986 = vrot.slane %v985, 2
    %v987 = vmax.f32 %v985, %v986
    %v988 = vrot.slane %v987, 1
    %v989 = vmax.f32 %v987, %v988
    %v990 = vsel %vm116, %v950, -inf
    %v991 = vrot.slane %v990, 4
    %v992 = vmax.f32 %v990, %v991
    %v993 = vrot.slane %v992, 2
    %v994 = vmax.f32 %v992, %v993
    %v995 = vrot.slane %v994, 1
    %v996 = vmax.f32 %v994, %v995
    %v997 = vsel %vm116, %v951, -inf
    %v998 = vrot.slane %v997, 4
    %v999 = vmax.f32 %v997, %v998
    %v1000 = vrot.slane %v999, 2
    %v1001 = vmax.f32 %v999, %v1000
    %v1002 = vrot.slane %v1001, 1
    %v1003 = vmax.f32 %v1001, %v1002
    %v1004 = vsel %vm116, %v952, -inf
    %v1005 = vrot.slane %v1004, 4
    %v1006 = vmax.f32 %v1004, %v1005
    %v1007 = vrot.slane %v1006, 2
    %v1008 = vmax.f32 %v1006, %v1007
    %v1009 = vrot.slane %v1008, 1
    %v1010 = vmax.f32 %v1008, %v1009
    %v1011 = vsel %vm116, %v953, -inf
    %v1012 = vrot.slane %v1011, 4
    %v1013 = vmax.f32 %v1011, %v1012
    %v1014 = vrot.slane %v1013, 2
    %v1015 = vmax.f32 %v1013, %v1014
    %v1016 = vrot.slane %v1015, 1
    %v1017 = vmax.f32 %v1015, %v1016
    %v1018 = vsel %vm116, %v954, -inf
    %v1019 = vrot.slane %v1018, 4
    %v1020 = vmax.f32 %v1018, %v1019
    %v1021 = vrot.slane %v1020, 2
    %v1022 = vmax.f32 %v1020, %v1021
    %v1023 = vrot.slane %v1022, 1
    %v1024 = vmax.f32 %v1022, %v1023
    %v1025 = vsel %vm116, %v955, -inf
    %v1026 = vrot.slane %v1025, 4
    %v1027 = vmax.f32 %v1025, %v1026
    %v1028 = vrot.slane %v1027, 2
    %v1029 = vmax.f32 %v1027, %v1028
    %v1030 = vrot.slane %v1029, 1
    %v1031 = vmax.f32 %v1029, %v1030
    %v1032 = vsel %vm116, %v956, -inf
    %v1033 = vrot.slane %v1032, 4
    %v1034 = vmax.f32 %v1032, %v1033
    %v1035 = vrot.slane %v1034, 2
    %v1036 = vmax.f32 %v1034, %v1035
    %v1037 = vrot.slane %v1036, 1
    %v1038 = vmax.f32 %v1036, %v1037
    %v1039 = vsel %vm116, %v957, -inf
    %v1040 = vrot.slane %v1039, 4
    %v1041 = vmax.f32 %v1039, %v1040
    %v1042 = vrot.slane %v1041, 2
    %v1043 = vmax.f32 %v1041, %v1042
    %v1044 = vrot.slane %v1043, 1
    %v1045 = vmax.f32 %v1043, %v1044
    %v1046 = vsel %vm116, %v958, -inf
    %v1047 = vrot.slane %v1046, 4
    %v1048 = vmax.f32 %v1046, %v1047
    %v1049 = vrot.slane %v1048, 2
    %v1050 = vmax.f32 %v1048, %v1049
    %v1051 = vrot.slane %v1050, 1
    %v1052 = vmax.f32 %v1050, %v1051
    %v1053 = vsel %vm116, %v959, -inf
    %v1054 = vrot.slane %v1053, 4
    %v1055 = vmax.f32 %v1053, %v1054
    %v1056 = vrot.slane %v1055, 2
    %v1057 = vmax.f32 %v1055, %v1056
    %v1058 = vrot.slane %v1057, 1
    %v1059 = vmax.f32 %v1057, %v1058
    %v1060 = vsel %vm116, %v960, -inf
    %v1061 = vrot.slane %v1060, 4
    %v1062 = vmax.f32 %v1060, %v1061
    %v1063 = vrot.slane %v1062, 2
    %v1064 = vmax.f32 %v1062, %v1063
    %v1065 = vrot.slane %v1064, 1
    %v1066 = vmax.f32 %v1064, %v1065
    %v1067 = vsel %vm116, %v961, -inf
    %v1068 = vrot.slane %v1067, 4
    %v1069 = vmax.f32 %v1067, %v1068
    %v1070 = vrot.slane %v1069, 2
    %v1071 = vmax.f32 %v1069, %v1070
    %v1072 = vrot.slane %v1071, 1
    %v1073 = vmax.f32 %v1071, %v1072
    %v1074 = vsub.f32 %v946, %v968
    %v1075 = vsub.f32 %v947, %v975
    %v1076 = vsub.f32 %v948, %v982
    %v1077 = vsub.f32 %v949, %v989
    %v1078 = vsub.f32 %v950, %v996
    %v1079 = vsub.f32 %v951, %v1003
    %v1080 = vsub.f32 %v952, %v1010
    %v1081 = vsub.f32 %v953, %v1017
    %v1082 = vsub.f32 %v954, %v1024
    %v1083 = vsub.f32 %v955, %v1031
    %v1084 = vsub.f32 %v956, %v1038
    %v1085 = vsub.f32 %v957, %v1045
    %v1086 = vsub.f32 %v958, %v1052
    %v1087 = vsub.f32 %v959, %v1059
    %v1088 = vsub.f32 %v960, %v1066
    %v1089 = vsub.f32 %v961, %v1073
    %v1090 = vmul.f32 %v1074, 1.442695
    %v1091 = vpow.pop %v1090
    %v1092 = vmul.f32 %v1075, 1.442695
    %v1093 = vpow.pop %v1092
    %v1094 = vmul.f32 %v1076, 1.442695
    %v1095 = vpow.pop %v1094
    %v1096 = vmul.f32 %v1077, 1.442695
    %v1097 = vpow.pop %v1096
    %v1098 = vmul.f32 %v1078, 1.442695
    %v1099 = vpow.pop %v1098
    %v1100 = vmul.f32 %v1079, 1.442695
    %v1101 = vpow.pop %v1100
    %v1102 = vmul.f32 %v1080, 1.442695
    %v1103 = vpow.pop %v1102
    %v1104 = vmul.f32 %v1081, 1.442695
    %v1105 = vpow.pop %v1104
    %v1106 = vmul.f32 %v1082, 1.442695
    %v1107 = vpow.pop %v1106
    %v1108 = vmul.f32 %v1083, 1.442695
    %v1109 = vpow.pop %v1108
    %v1110 = vmul.f32 %v1084, 1.442695
    %v1111 = vpow.pop %v1110
    %v1112 = vmul.f32 %v1085, 1.442695
    %v1113 = vpow.pop %v1112
    %v1114 = vmul.f32 %v1086, 1.442695
    %v1115 = vpow.pop %v1114
    %v1116 = vmul.f32 %v1087, 1.442695
    %v1117 = vpow.pop %v1116
    %v1118 = vmul.f32 %v1088, 1.442695
    %v1119 = vpow.pop %v1118
    %v1120 = vmul.f32 %v1089, 1.442695
    %v1121 = vpow.pop %v1120
    %v1122 = vsel %vm116, %v1091, 0.0
    %v1123 = vrot.slane %v1122, 4
    %v1124 = vadd.f32 %v1122, %v1123
    %v1125 = vrot.slane %v1124, 2
    %v1126 = vadd.f32 %v1124, %v1125
    %v1127 = vrot.slane %v1126, 1
    %v1128 = vadd.f32 %v1126, %v1127
    %v1129 = vsel %vm116, %v1093, 0.0
    %v1130 = vrot.slane %v1129, 4
    %v1131 = vadd.f32 %v1129, %v1130
    %v1132 = vrot.slane %v1131, 2
    %v1133 = vadd.f32 %v1131, %v1132
    %v1134 = vrot.slane %v1133, 1
    %v1135 = vadd.f32 %v1133, %v1134
    %v1136 = vsel %vm116, %v1095, 0.0
    %v1137 = vrot.slane %v1136, 4
    %v1138 = vadd.f32 %v1136, %v1137
    %v1139 = vrot.slane %v1138, 2
    %v1140 = vadd.f32 %v1138, %v1139
    %v1141 = vrot.slane %v1140, 1
    %v1142 = vadd.f32 %v1140, %v1141
    %v1143 = vsel %vm116, %v1097, 0.0
    %v1144 = vrot.slane %v1143, 4
    %v1145 = vadd.f32 %v1143, %v1144
    %v1146 = vrot.slane %v1145, 2
    %v1147 = vadd.f32 %v1145, %v1146
    %v1148 = vrot.slane %v1147, 1
    %v1149 = vadd.f32 %v1147, %v1148
    %v1150 = vsel %vm116, %v1099, 0.0
    %v1151 = vrot.slane %v1150, 4
    %v1152 = vadd.f32 %v1150, %v1151
    %v1153 = vrot.slane %v1152, 2
    %v1154 = vadd.f32 %v1152, %v1153
    %v1155 = vrot.slane %v1154, 1
    %v1156 = vadd.f32 %v1154, %v1155
    %v1157 = vsel %vm116, %v1101, 0.0
    %v1158 = vrot.slane %v1157, 4
    %v1159 = vadd.f32 %v1157, %v1158
    %v1160 = vrot.slane %v1159, 2
    %v1161 = vadd.f32 %v1159, %v1160
    %v1162 = vrot.slane %v1161, 1
    %v1163 = vadd.f32 %v1161, %v1162
    %v1164 = vsel %vm116, %v1103, 0.0
    %v1165 = vrot.slane %v1164, 4
    %v1166 = vadd.f32 %v1164, %v1165
    %v1167 = vrot.slane %v1166, 2
    %v1168 = vadd.f32 %v1166, %v1167
    %v1169 = vrot.slane %v1168, 1
    %v1170 = vadd.f32 %v1168, %v1169
    %v1171 = vsel %vm116, %v1105, 0.0
    %v1172 = vrot.slane %v1171, 4
    %v1173 = vadd.f32 %v1171, %v1172
    %v1174 = vrot.slane %v1173, 2
    %v1175 = vadd.f32 %v1173, %v1174
    %v1176 = vrot.slane %v1175, 1
    %v1177 = vadd.f32 %v1175, %v1176
    %v1178 = vsel %vm116, %v1107, 0.0
    %v1179 = vrot.slane %v1178, 4
    %v1180 = vadd.f32 %v1178, %v1179
    %v1181 = vrot.slane %v1180, 2
    %v1182 = vadd.f32 %v1180, %v1181
    %v1183 = vrot.slane %v1182, 1
    %v1184 = vadd.f32 %v1182, %v1183
    %v1185 = vsel %vm116, %v1109, 0.0
    %v1186 = vrot.slane %v1185, 4
    %v1187 = vadd.f32 %v1185, %v1186
    %v1188 = vrot.slane %v1187, 2
    %v1189 = vadd.f32 %v1187, %v1188
    %v1190 = vrot.slane %v1189, 1
    %v1191 = vadd.f32 %v1189, %v1190
    %v1192 = vsel %vm116, %v1111, 0.0
    %v1193 = vrot.slane %v1192, 4
    %v1194 = vadd.f32 %v1192, %v1193
    %v1195 = vrot.slane %v1194, 2
    %v1196 = vadd.f32 %v1194, %v1195
    %v1197 = vrot.slane %v1196, 1
    %v1198 = vadd.f32 %v1196, %v1197
    %v1199 = vsel %vm116, %v1113, 0.0
    %v1200 = vrot.slane %v1199, 4
    %v1201 = vadd.f32 %v1199, %v1200
    %v1202 = vrot.slane %v1201, 2
    %v1203 = vadd.f32 %v1201, %v1202
    %v1204 = vrot.slane %v1203, 1
    %v1205 = vadd.f32 %v1203, %v1204
    %v1206 = vsel %vm116, %v1115, 0.0
    %v1207 = vrot.slane %v1206, 4
    %v1208 = vadd.f32 %v1206, %v1207
    %v1209 = vrot.slane %v1208, 2
    %v1210 = vadd.f32 %v1208, %v1209
    %v1211 = vrot.slane %v1210, 1
    %v1212 = vadd.f32 %v1210, %v1211
    %v1213 = vsel %vm116, %v1117, 0.0
    %v1214 = vrot.slane %v1213, 4
    %v1215 = vadd.f32 %v1213, %v1214
    %v1216 = vrot.slane %v1215, 2
    %v1217 = vadd.f32 %v1215, %v1216
    %v1218 = vrot.slane %v1217, 1
    %v1219 = vadd.f32 %v1217, %v1218
    %v1220 = vsel %vm116, %v1119, 0.0
    %v1221 = vrot.slane %v1220, 4
    %v1222 = vadd.f32 %v1220, %v1221
    %v1223 = vrot.slane %v1222, 2
    %v1224 = vadd.f32 %v1222, %v1223
    %v1225 = vrot.slane %v1224, 1
    %v1226 = vadd.f32 %v1224, %v1225
    %v1227 = vsel %vm116, %v1121, 0.0
    %v1228 = vrot.slane %v1227, 4
    %v1229 = vadd.f32 %v1227, %v1228
    %v1230 = vrot.slane %v1229, 2
    %v1231 = vadd.f32 %v1229, %v1230
    %v1232 = vrot.slane %v1231, 1
    %v1233 = vadd.f32 %v1231, %v1232
    %v1234 = vrcp.pop %v1128
    %v1235 = vmul.f32 %v1091, %v1234
    %v1236 = vrcp.pop %v1135
    %v1237 = vmul.f32 %v1093, %v1236
    %v1238 = vrcp.pop %v1142
    %v1239 = vmul.f32 %v1095, %v1238
    %v1240 = vrcp.pop %v1149
    %v1241 = vmul.f32 %v1097, %v1240
    %v1242 = vrcp.pop %v1156
    %v1243 = vmul.f32 %v1099, %v1242
    %v1244 = vrcp.pop %v1163
    %v1245 = vmul.f32 %v1101, %v1244
    %v1246 = vrcp.pop %v1170
    %v1247 = vmul.f32 %v1103, %v1246
    %v1248 = vrcp.pop %v1177
    %v1249 = vmul.f32 %v1105, %v1248
    %v1250 = vrcp.pop %v1184
    %v1251 = vmul.f32 %v1107, %v1250
    %v1252 = vrcp.pop %v1191
    %v1253 = vmul.f32 %v1109, %v1252
    %v1254 = vrcp.pop %v1198
    %v1255 = vmul.f32 %v1111, %v1254
    %v1256 = vrcp.pop %v1205
    %v1257 = vmul.f32 %v1113, %v1256
    %v1258 = vrcp.pop %v1212
    %v1259 = vmul.f32 %v1115, %v1258
    %v1260 = vrcp.pop %v1219
    %v1261 = vmul.f32 %v1117, %v1260
    %v1262 = vrcp.pop %v1226
    %v1263 = vmul.f32 %v1119, %v1262
    %v1264 = vrcp.pop %v1233
    %v1265 = vmul.f32 %v1121, %v1264
    %v1266 = vmul.f32 %v1235, %v190
    %v1267 = vmul.f32 %v1237, %v190
    %v1268 = vmul.f32 %v1239, %v190
    %v1269 = vmul.f32 %v1241, %v190
    %v1270 = vmul.f32 %v1243, %v190
    %v1271 = vmul.f32 %v1245, %v190
    %v1272 = vmul.f32 %v1247, %v190
    %v1273 = vmul.f32 %v1249, %v190
    %v1274 = vmul.f32 %v1251, %v195
    %v1275 = vmul.f32 %v1253, %v195
    %v1276 = vmul.f32 %v1255, %v195
    %v1277 = vmul.f32 %v1257, %v195
    %v1278 = vmul.f32 %v1259, %v195
    %v1279 = vmul.f32 %v1261, %v195
    %v1280 = vmul.f32 %v1263, %v195
    %v1281 = vmul.f32 %v1265, %v195
    %v1282 = vsel %vm116, %v1266, 0.0
    %v1283 = vrot.slane %v1282, 4
    %v1284 = vadd.f32 %v1282, %v1283
    %v1285 = vrot.slane %v1284, 2
    %v1286 = vadd.f32 %v1284, %v1285
    %v1287 = vrot.slane %v1286, 1
    %v1288 = vadd.f32 %v1286, %v1287
    %v1289 = vsel %vm116, %v1267, 0.0
    %v1290 = vrot.slane %v1289, 4
    %v1291 = vadd.f32 %v1289, %v1290
    %v1292 = vrot.slane %v1291, 2
    %v1293 = vadd.f32 %v1291, %v1292
    %v1294 = vrot.slane %v1293, 1
    %v1295 = vadd.f32 %v1293, %v1294
    %v1296 = vsel %vm116, %v1268, 0.0
    %v1297 = vrot.slane %v1296, 4
    %v1298 = vadd.f32 %v1296, %v1297
    %v1299 = vrot.slane %v1298, 2
    %v1300 = vadd.f32 %v1298, %v1299
    %v1301 = vrot.slane %v1300, 1
    %v1302 = vadd.f32 %v1300, %v1301
    %v1303 = vsel %vm116, %v1269, 0.0
    %v1304 = vrot.slane %v1303, 4
    %v1305 = vadd.f32 %v1303, %v1304
    %v1306 = vrot.slane %v1305, 2
    %v1307 = vadd.f32 %v1305, %v1306
    %v1308 = vrot.slane %v1307, 1
    %v1309 = vadd.f32 %v1307, %v1308
    %v1310 = vsel %vm116, %v1270, 0.0
    %v1311 = vrot.slane %v1310, 4
    %v1312 = vadd.f32 %v1310, %v1311
    %v1313 = vrot.slane %v1312, 2
    %v1314 = vadd.f32 %v1312, %v1313
    %v1315 = vrot.slane %v1314, 1
    %v1316 = vadd.f32 %v1314, %v1315
    %v1317 = vsel %vm116, %v1271, 0.0
    %v1318 = vrot.slane %v1317, 4
    %v1319 = vadd.f32 %v1317, %v1318
    %v1320 = vrot.slane %v1319, 2
    %v1321 = vadd.f32 %v1319, %v1320
    %v1322 = vrot.slane %v1321, 1
    %v1323 = vadd.f32 %v1321, %v1322
    %v1324 = vsel %vm116, %v1272, 0.0
    %v1325 = vrot.slane %v1324, 4
    %v1326 = vadd.f32 %v1324, %v1325
    %v1327 = vrot.slane %v1326, 2
    %v1328 = vadd.f32 %v1326, %v1327
    %v1329 = vrot.slane %v1328, 1
    %v1330 = vadd.f32 %v1328, %v1329
    %v1331 = vsel %vm116, %v1273, 0.0
    %v1332 = vrot.slane %v1331, 4
    %v1333 = vadd.f32 %v1331, %v1332
    %v1334 = vrot.slane %v1333, 2
    %v1335 = vadd.f32 %v1333, %v1334
    %v1336 = vrot.slane %v1335, 1
    %v1337 = vadd.f32 %v1335, %v1336
    %v1338 = vsel %vm116, %v1274, 0.0
    %v1339 = vrot.slane %v1338, 4
    %v1340 = vadd.f32 %v1338, %v1339
    %v1341 = vrot.slane %v1340, 2
    %v1342 = vadd.f32 %v1340, %v1341
    %v1343 = vrot.slane %v1342, 1
    %v1344 = vadd.f32 %v1342, %v1343
    %v1345 = vsel %vm116, %v1275, 0.0
    %v1346 = vrot.slane %v1345, 4
    %v1347 = vadd.f32 %v1345, %v1346
    %v1348 = vrot.slane %v1347, 2
    %v1349 = vadd.f32 %v1347, %v1348
    %v1350 = vrot.slane %v1349, 1
    %v1351 = vadd.f32 %v1349, %v1350
    %v1352 = vsel %vm116, %v1276, 0.0
    %v1353 = vrot.slane %v1352, 4
    %v1354 = vadd.f32 %v1352, %v1353
    %v1355 = vrot.slane %v1354, 2
    %v1356 = vadd.f32 %v1354, %v1355
    %v1357 = vrot.slane %v1356, 1
    %v1358 = vadd.f32 %v1356, %v1357
    %v1359 = vsel %vm116, %v1277, 0.0
    %v1360 = vrot.slane %v1359, 4
    %v1361 = vadd.f32 %v1359, %v1360
    %v1362 = vrot.slane %v1361, 2
    %v1363 = vadd.f32 %v1361, %v1362
    %v1364 = vrot.slane %v1363, 1
    %v1365 = vadd.f32 %v1363, %v1364
    %v1366 = vsel %vm116, %v1278, 0.0
    %v1367 = vrot.slane %v1366, 4
    %v1368 = vadd.f32 %v1366, %v1367
    %v1369 = vrot.slane %v1368, 2
    %v1370 = vadd.f32 %v1368, %v1369
    %v1371 = vrot.slane %v1370, 1
    %v1372 = vadd.f32 %v1370, %v1371
    %v1373 = vsel %vm116, %v1279, 0.0
    %v1374 = vrot.slane %v1373, 4
    %v1375 = vadd.f32 %v1373, %v1374
    %v1376 = vrot.slane %v1375, 2
    %v1377 = vadd.f32 %v1375, %v1376
    %v1378 = vrot.slane %v1377, 1
    %v1379 = vadd.f32 %v1377, %v1378
    %v1380 = vsel %vm116, %v1280, 0.0
    %v1381 = vrot.slane %v1380, 4
    %v1382 = vadd.f32 %v1380, %v1381
    %v1383 = vrot.slane %v1382, 2
    %v1384 = vadd.f32 %v1382, %v1383
    %v1385 = vrot.slane %v1384, 1
    %v1386 = vadd.f32 %v1384, %v1385
    %v1387 = vsel %vm116, %v1281, 0.0
    %v1388 = vrot.slane %v1387, 4
    %v1389 = vadd.f32 %v1387, %v1388
    %v1390 = vrot.slane %v1389, 2
    %v1391 = vadd.f32 %v1389, %v1390
    %v1392 = vrot.slane %v1391, 1
    %v1393 = vadd.f32 %v1391, %v1392
    %v1394 = vld [vmem:[#allocation10] sm:$0xff]
    %v1395 = vld [vmem:[#allocation10 + $0x8] sm:$0xff]
    %v1396 = vld [vmem:[#allocation10 + $0x10] sm:$0xff]
    %v1397 = vld [vmem:[#allocation10 + $0x18] sm:$0xff]
    %v1398 = vld [vmem:[#allocation10 + $0x20] sm:$0xff]
    %v1399 = vld [vmem:[#allocation10 + $0x28] sm:$0xff]
    %v1400 = vld [vmem:[%s8] sm:$0x1]
    %v1402 = vlaneseq
    %v1403 = vshrl.u32 %v1402, 7
    %v1404 = vsub.s32 0, %v1403
    %v1405 = vrot.slane %v1400, %v1404
    %vm1423 = vcmask 1041409
    %v1424 = vsel %vm1423, %v1295, %v1288
    %vm1425 = vcmask 1042434
    %v1426 = vsel %vm1425, %v1302, %v1424
    %vm1427 = vcmask 1043459
    %v1428 = vsel %vm1427, %v1309, %v1426
    %vm1429 = vcmask 1044484
    %v1430 = vsel %vm1429, %v1316, %v1428
    %vm1431 = vcmask 1045509
    %v1432 = vsel %vm1431, %v1323, %v1430
    %vm1433 = vcmask 1046534
    %v1434 = vsel %vm1433, %v1330, %v1432
    %vm1435 = vcmask 1047559
    %v1436 = vsel %vm1435, %v1337, %v1434
    %v1437 = vsel %vm1423, %v1351, %v1344
    %v1438 = vsel %vm1425, %v1358, %v1437
    %v1439 = vsel %vm1427, %v1365, %v1438
    %v1440 = vsel %vm1429, %v1372, %v1439
    %v1441 = vsel %vm1431, %v1379, %v1440
    %v1442 = vsel %vm1433, %v1386, %v1441
    %v1443 = vsel %vm1435, %v1393, %v1442
    %v1444 = vsel %vm116, %v1436, 0
    %v1446 = vsel %vm116, %v1443, 0
    %1448 = vmatprep.subr.mxu0 0.0
    %1449 = vmatpush1.msra.mxu0 0.0
    %1450 = vmatprep.subr.mxu0 0.0
    %1451 = vmatpush1.msra.mxu0 0.0
    %1452 = vmatprep.subr.mxu0 0.0
    %1453 = vmatpush1.msra.mxu0 0.0
    %1454 = vmatprep.subr.mxu0 0.0
    %1455 = vmatpush1.msra.mxu0 0.0
    %1456 = vmatprep.subr.mxu0 0.0
    %1457 = vmatpush1.msra.mxu0 0.0
    %1458 = vmatprep.subr.mxu0 0.0
    %1459 = vmatpush1.msra.mxu0 0.0
    %1460 = vmatprep.subr.mxu0 0.0
    %1461 = vmatpush1.msra.mxu0 0.0
    %1462 = vmatprep.subr.mxu0 0.0
    %1463 = vmatpush1.msra.mxu0 0.0
    %1464 = vmatprep.subr.mxu0 0.0
    %1465 = vmatpush1.msra.mxu0 0.0
    %1466 = vmatprep.subr.mxu0 0.0
    %1467 = vmatpush1.msra.mxu0 0.0
    %1468 = vmatprep.subr.mxu0 0.0
    %1469 = vmatpush1.msra.mxu0 %v1399
    %1470 = vmatprep.subr.mxu0 0.0
    %1471 = vmatpush1.msra.mxu0 %v1398
    %1472 = vmatprep.subr.mxu0 0.0
    %1473 = vmatpush1.msra.mxu0 %v1397
    %1474 = vmatprep.subr.mxu0 0.0
    %1475 = vmatpush1.msra.mxu0 %v1396
    %1476 = vmatprep.subr.mxu0 0.0
    %1477 = vmatpush1.msra.mxu0 %v1395
    %1478 = vmatprep.subr.mxu0 0.0
    %1479 = vmatpush1.msra.mxu0 %v1394
    %1480 = vmatprep.subr.mxu0 0.0
    %1481 = vmatpush2.msra.mxu0 0.0
    %1482 = vmatprep.subr.mxu0 0.0
    %1483 = vmatpush2.msra.mxu0 0.0
    %1484 = vmatprep.subr.mxu0 0.0
    %1485 = vmatpush2.msra.mxu0 0.0
    %1486 = vmatprep.subr.mxu0 0.0
    %1487 = vmatpush2.msra.mxu0 0.0
    %1488 = vmatprep.subr.mxu0 0.0
    %1489 = vmatpush2.msra.mxu0 0.0
    %1490 = vmatprep.subr.mxu0 0.0
    %1491 = vmatpush2.msra.mxu0 0.0
    %1492 = vmatprep.subr.mxu0 0.0
    %1493 = vmatpush2.msra.mxu0 0.0
    %1494 = vmatprep.subr.mxu0 0.0
    %1495 = vmatpush2.msra.mxu0 0.0
    %1496 = vmatprep.subr.mxu0 0.0
    %1497 = vmatpush2.msra.mxu0 0.0
    %1498 = vmatprep.subr.mxu0 0.0
    %1499 = vmatpush2.msra.mxu0 0.0
    %1500 = vmatprep.subr.mxu0 0.0
    %1501 = vmatpush2.msra.mxu0 0.0
    %1502 = vmatprep.subr.mxu0 0.0
    %1503 = vmatpush2.msra.mxu0 0.0
    %1504 = vmatprep.subr.mxu0 0.0
    %1505 = vmatpush2.msra.mxu0 0.0
    %1506 = vmatprep.subr.mxu0 0.0
    %1507 = vmatpush2.msra.mxu0 0.0
    %1508 = vmatprep.subr.mxu0 0.0
    %1509 = vmatpush2.msra.mxu0 0.0
    %1510 = vmatprep.subr.mxu0 0.0
    %1511 = vmatpush2.msra.mxu0 0.0
    %1512 = vmatprep.mubr.f32.mxu0 0.0
    %1513 = vmatmul.mubr.f32.gmra.mxu0 %v1444
    %v1514 = vpop.f32.mrf.mxu0
    %v1515 = vadd.f32 %v1405, %v1514
    %v1516 = vpop.f32.mrf.mxu0
    %1517 = vmatprep.mubr.f32.mxu0 0.0
    %1518 = vmatmul.mubr.f32.gmra.mxu0 %v1446
    %v1519 = vpop.f32.mrf.mxu0
    %v1520 = vadd.f32 %v1405, %v1519
    %v1521 = vpop.f32.mrf.mxu0
    %1522 = vdwg.mxu0
    %1523 = vst.msk [vmem:[#allocation11] sm:$0xff] %vm116, %v1515
    %1524 = vst.msk [vmem:[#allocation11 + $0x8] sm:$0xff] %vm116, %v1520
    // Predicated region
    $region58: #{tpu_custom_call.1} parent=1 // pred_check
      _
    $region59: #{tpu_custom_call.1} parent=1 // pred_check_branch
      %1526 = sbr.rel (0) target = $region61
    $region60: #{tpu_custom_call.1} parent=1 // pred_region
      %s1528 = ssub.s32 256, 256
      %1529 = vsyncadd [#allocation4], %s1528
      %s1530 = sshll.u32 [#allocation11], 4
      %s1531 = int_to_ptr.vmem [resolvable:$true] %s1530
      %1536 = dma.vmem_to_hbm [thread:$0]  %s1531, 256, %s9, [#allocation4], 128, 128, 8
    $region61: #{tpu_custom_call.1} parent=1 // pred_fallthru
      _
    // Predicated region
    $region62: #{tpu_custom_call.1} parent=1 // pred_check
      _
    $region63: #{tpu_custom_call.1} parent=1 // pred_check_branch
      %1538 = sbr.rel (0) target = $region65
    $region64: #{tpu_custom_call.1} parent=1 // pred_region
      %1539 = dma.done [#allocation4], 256
    $region65: #{tpu_custom_call.1} parent=1 // pred_fallthru
      _
    %1540 = vsyncpa [#allocation3], 1
    %1541 = vsyncpa [#allocation6], 1
    %1542 = vsyncpa [#allocation9], 1
    %1543 = vsyncpa [#allocation4], 1

</llo_original>
